<compile_context>
chip_gen: v6e
topology: v6e:2x2x1
jax: 0.10.0
libtpu: 0.0.40
codegen_flags: <defaults>
</compile_context>

<pallas_src>
import jax
import jax.numpy as jnp
from jax import lax
import numpy as np
from jax.experimental import pallas as pl
from jax.experimental.pallas import tpu as pltpu


# ----------------------------------------------------------------------------
# Glue helpers (plain JAX) mirroring the PyTorch module's dependencies
# ----------------------------------------------------------------------------
def rotation_6d_to_matrix(d6):
    """Zhou et al. 6D -> 3x3 rotation (rows b1,b2,b3), matches pytorch3d."""
    a1, a2 = d6[..., :3], d6[..., 3:]
    b1 = a1 / jnp.linalg.norm(a1, axis=-1, keepdims=True)
    b2 = a2 - jnp.sum(b1 * a2, axis=-1, keepdims=True) * b1
    b2 = b2 / jnp.linalg.norm(b2, axis=-1, keepdims=True)
    b3 = jnp.cross(b1, b2)
    return jnp.stack([b1, b2, b3], axis=-2)


def _bilinear_sample_plane(plane, uv):
    """plane: (bs, C, Hp, Wp) NCHW; uv: (bs, N, 2) in [-1,1] (x=width, y=height).
    align_corners=True, border padding."""
    bs, C, Hp, Wp = plane.shape
    x = (uv[..., 0] + 1.0) * 0.5 * (Wp - 1)
    y = (uv[..., 1] + 1.0) * 0.5 * (Hp - 1)
    x0 = jnp.clip(jnp.floor(x), 0, Wp - 1)
    y0 = jnp.clip(jnp.floor(y), 0, Hp - 1)
    x1 = jnp.clip(x0 + 1, 0, Wp - 1)
    y1 = jnp.clip(y0 + 1, 0, Hp - 1)
    wx = jnp.clip(x - x0, 0.0, 1.0)[..., None]
    wy = jnp.clip(y - y0, 0.0, 1.0)[..., None]
    x0i, x1i = x0.astype(jnp.int32), x1.astype(jnp.int32)
    y0i, y1i = y0.astype(jnp.int32), y1.astype(jnp.int32)
    bidx = jnp.arange(bs)[:, None]
    p = jnp.transpose(plane, (0, 2, 3, 1))  # (bs, Hp, Wp, C)
    f00 = p[bidx, y0i, x0i]
    f01 = p[bidx, y0i, x1i]
    f10 = p[bidx, y1i, x0i]
    f11 = p[bidx, y1i, x1i]
    top = f00 * (1.0 - wx) + f01 * wx
    bot = f10 * (1.0 - wx) + f11 * wx
    return top * (1.0 - wy) + bot * wy  # (bs, N, C)


def bilinear_sampler(pos, c):
    # TODO(synk): original BilinearSampler source not provided; implemented as
    # tri-plane bilinear sampling summed over 'xy','xz','yz'.
    x, y, z = pos[..., 0], pos[..., 1], pos[..., 2]
    f = _bilinear_sample_plane(c['xy'], jnp.stack([x, y], -1))
    f = f + _bilinear_sample_plane(c['xz'], jnp.stack([x, z], -1))
    f = f + _bilinear_sample_plane(c['yz'], jnp.stack([y, z], -1))
    return f


# ----------------------------------------------------------------------------
# Pallas kernel: fused q projection + attention over control points (with the
# k/v projections pushed through the linearity) + output projection + residual.
# Everything is channel-major: tokens live on the 128-lane axis, so the output
# store is lane-dense and no in-kernel transpose is needed.  num_heads == 1.
# ----------------------------------------------------------------------------
def _attn_kernel(fT_ref, sfT_ref, wqT_ref, bqT_ref, wk_ref, bkpe_ref,
                 wvT_ref, bvT_ref, woT_ref, boT_ref, o_ref):
    fT = fT_ref[...]                          # (C, tbn)       f32
    sfT = sfT_ref[...]                        # (C, G, tbn)    f32

    # q^T = sqrt(H) * (wq^T f^T + (bq + pe_q)^T)   (scale folded in wrapper)
    qT = jnp.dot(wqT_ref[...], fT,
                 preferred_element_type=jnp.float32) + bqT_ref[...]      # (H, tbn)

    # Logits, pushed through the (linear) k projection:
    #   sim[g,t] = sum_c sf[c,g,t] * (wk q)[c,t]  +  ((bk + pe_k) q)[g,t]
    qkT = jnp.dot(wk_ref[...], qT,
                  preferred_element_type=jnp.float32)                    # (C, tbn)
    sim = jnp.sum(sfT * qkT[:, None, :], axis=0)                         # (G, tbn)
    sim = sim + jnp.dot(bkpe_ref[...], qT,
                        preferred_element_type=jnp.float32)              # (G, tbn)

    # Numerically stable softmax over the control-point axis (exact division;
    # the approx reciprocal was the easiest accuracy loss to give back).
    sim = sim - jnp.max(sim, axis=0, keepdims=True)
    p = jnp.exp(sim)
    attn = p / jnp.sum(p, axis=0, keepdims=True)                         # (G, tbn)

    # Attention output, pushed through the (linear) v projection
    # (valid because sum_g attn[g,t] == 1):
    #   out = (sum_g attn[g] * sf[:,g]) wv + bv
    wsfT = jnp.sum(attn[None, :, :] * sfT, axis=1)                       # (C, tbn)
    ovT = jnp.dot(wvT_ref[...], wsfT,
                  preferred_element_type=jnp.float32) + bvT_ref[...]     # (H, tbn)

    # Output projection + bias + residual; already channel-major -> lane-dense store.
    yT = jnp.dot(woT_ref[...], ovT,
                 preferred_element_type=jnp.float32) + boT_ref[...] + fT  # (C, tbn)
    o_ref[...] = yT.astype(o_ref.dtype)


def attn_pallas(feature, sample_feature, params, tbn_req=256):
    """feature: (BN, C); sample_feature: (BN, G, C).  Returns (BN, C)."""
    BN, C = feature.shape
    _, G, _ = sample_feature.shape
    H = params['wq'].shape[1]
    f32 = jnp.float32

    # ---- token tile: lane-dense (multiple of 128) with an even grid of at
    # least 2 tiles so both v7x TensorCores get work; largest tile <= tbn_req.
    L = 128
    tbn = max(L, min(tbn_req // L, max(1, pl.cdiv(BN, 2 * L))) * L)
    BN_pad = pl.cdiv(BN, 2 * tbn) * (2 * tbn)
    grid = BN_pad // tbn                      # even, >= 2

    # ---- fold constants (scale, positional encodings, biases), transposed ----
    scale = float(H) ** 0.5                   # module: q = (q + pe_q) / H**-0.5
    wqT = (params['wq'].astype(f32) * scale).T                          # (H, C)
    bqT = ((params['bq'] + params['pe_q']).astype(f32) * scale).reshape(H, 1)
    wk = params['wk'].astype(f32)                                       # (C, H)
    bkpe = (params['bk'] + params['pe_k']).astype(f32)                  # (G, H)
    wvT = params['wv'].astype(f32).T                                    # (H, C)
    bvT = params['bv'].astype(f32).reshape(H, 1)
    woT = params['wo'].astype(f32).T                                    # (C, H)
    boT = params['bo'].astype(f32).reshape(C, 1)

    # ---- channel-major (token-on-lanes) inputs; one transpose, one pad ----
    fT = feature.astype(f32).T                                          # (C, BN)
    sfT = jnp.transpose(sample_feature.astype(f32), (2, 1, 0))          # (C, G, BN)
    if BN_pad != BN:
        fT = jnp.pad(fT, ((0, 0), (0, BN_pad - BN)))
        sfT = jnp.pad(sfT, ((0, 0), (0, 0), (0, BN_pad - BN)))
    # TODO(synk): sfT could be stored bf16 (halves HBM/VMEM traffic) with f32
    #             upcast before the elementwise math; kept f32 for accuracy.

    w00 = lambda i: (0, 0)
    cost = pl.CostEstimate(
        flops=2 * BN_pad * (4 * C * H + 2 * C * G + H * G),
        transcendentals=BN_pad * G,
        bytes_accessed=4 * (BN_pad * G * C + 2 * BN_pad * C))

    out_t = pl.pallas_call(
        _attn_kernel,
        out_shape=jax.ShapeDtypeStruct((C, BN_pad), f32),
        grid_spec=pltpu.PrefetchScalarGridSpec(
            num_scalar_prefetch=0,
            grid=(grid,),
            in_specs=[
                pl.BlockSpec((C, tbn), lambda i: (0, i)),        # feature^T
                pl.BlockSpec((C, G, tbn), lambda i: (0, 0, i)),  # sample_feature^T
                pl.BlockSpec((H, C), w00),                       # wq^T * sqrt(H)
                pl.BlockSpec((H, 1), w00),                       # (bq+pe_q)^T * sqrt(H)
                pl.BlockSpec((C, H), w00),                       # wk
                pl.BlockSpec((G, H), w00),                       # bk + pe_k
                pl.BlockSpec((H, C), w00),                       # wv^T
                pl.BlockSpec((H, 1), w00),                       # bv^T
                pl.BlockSpec((C, H), w00),                       # wo^T
                pl.BlockSpec((C, 1), w00),                       # bo^T
            ],
            out_specs=pl.BlockSpec((C, tbn), lambda i: (0, i)),  # channel-major
        ),
        compiler_params=pltpu.CompilerParams(
            dimension_semantics=("parallel",),
            vmem_limit_bytes=32 * 1024 * 1024),
        cost_estimate=cost,
    )(fT, sfT, wqT, bqT, wk, bkpe, wvT, bvT, woT, boT)
    return out_t[:, :BN].T.astype(feature.dtype)


# Pure-JAX reference of the same hot path (for correctness checking).
def attn_ref(feature, sample_feature, params):
    H = params['wq'].shape[1]
    scale = float(H) ** 0.5
    q = feature @ params['wq'] + params['bq']
    k = jnp.einsum('bgc,ch->bgh', sample_feature, params['wk']) + params['bk']
    v = jnp.einsum('bgc,ch->bgh', sample_feature, params['wv']) + params['bv']
    q = (q + params['pe_q']) * scale
    k = k + params['pe_k'][None]
    sim = jnp.einsum('bd,bgd->bg', q, k)
    sim = sim - jnp.max(sim, axis=-1, keepdims=True)
    attn = jax.nn.softmax(sim, axis=-1)
    out = jnp.einsum('bg,bgd->bd', attn, v)
    return out @ params['wo'] + params['bo'] + feature


# ----------------------------------------------------------------------------
# Full module forward (glue + Pallas kernel).  num_heads = 1, zero_offset=False.
# ----------------------------------------------------------------------------
def equi_grasp_forward(query_pos, c, params, use_pallas=True):
    bs, ns, _ = query_pos.shape
    C, H = params['wq'].shape
    G = params['control_points'].shape[0]
    nh = 1

    q_ori = query_pos[..., 3:]
    q_pos = query_pos[..., :3]

    feature = bilinear_sampler(q_pos, c).reshape(bs, ns, C)

    cp = jnp.broadcast_to(params['control_points'], (bs, ns, G, 3))
    rot = rotation_6d_to_matrix(q_ori).reshape(bs, ns, 3, 3)
    cp = jnp.einsum('bnpd,bngd->bngp', rot, cp)
    anchor = q_pos[:, :, None, :] + cp                         # (bs, ns, G, 3)

    # to_offset is a bias-free Linear constant-initialized to 0.0 in the module
    offset = (feature @ params['w_offset'].T).reshape(bs, ns, nh, 3)
    anchor = offset[:, :, :, None, :] + anchor[:, :, None, :, :]   # (bs,ns,nh,G,3)

    sample_feature = bilinear_sampler(anchor.reshape(bs, -1, 3), c)
    sample_feature = sample_feature.reshape(bs * ns, G, C)     # nh == 1

    feat_flat = feature.reshape(bs * ns, C)

    if use_pallas:
        out = attn_pallas(feat_flat, sample_feature, params)
    else:
        out = attn_ref(feat_flat, sample_feature, params)
    return out.reshape(bs, ns, C)


# ----------------------------------------------------------------------------
if __name__ == "__main__":
    bs, ns = 2, 256   # BN = 512 -> grid of 2 token tiles of 256
    C = 16            # in_type.size (feature_dim)
    hidden = 32       # hidden_type.size
    nh = 1
    Hp = Wp = 16

    # control points exactly as in the module
    num_inter = 5
    palm_y = np.linspace(-0.04, 0.04, num_inter)
    palm_z = np.linspace(0.0, 0.05, num_inter)
    palm_x = np.zeros(1)
    cp_np = np.stack(np.meshgrid(palm_x, palm_y, palm_z), axis=-1)
    cp_np = cp_np.reshape(-1, 3).astype('float32') / 0.3
    G = cp_np.shape[0]  # 25

    key = jax.random.PRNGKey(0)
    ks = jax.random.split(key, 16)
    sw = 0.1
    params = {
        'wq': sw * jax.random.normal(ks[0], (C, hidden), jnp.float32),
        'bq': sw * jax.random.normal(ks[1], (1, hidden), jnp.float32),
        'wk': sw * jax.random.normal(ks[2], (C, hidden), jnp.float32),
        'bk': sw * jax.random.normal(ks[3], (1, hidden), jnp.float32),
        'wv': sw * jax.random.normal(ks[4], (C, hidden), jnp.float32),
        'bv': sw * jax.random.normal(ks[5], (1, hidden), jnp.float32),
        'wo': sw * jax.random.normal(ks[6], (hidden, C), jnp.float32),
        'bo': sw * jax.random.normal(ks[7], (1, C), jnp.float32),
        'pe_k': jax.random.uniform(ks[8], (G, hidden), jnp.float32),
        'pe_q': jax.random.uniform(ks[9], (1, hidden), jnp.float32),
        'w_offset': jnp.zeros((nh * 3, C), jnp.float32),  # constant_init(., 0.0)
        'control_points': jnp.asarray(cp_np),
    }

    # inputs
    pos = jax.random.uniform(ks[10], (bs, ns, 3), jnp.float32, -0.8, 0.8)
    ori = jax.random.normal(ks[11], (bs, ns, 6), jnp.float32)
    query_pos = jnp.concatenate([pos, ori], axis=-1)          # (bs, ns, 9)
    c = {
        'xy': jax.random.normal(ks[12], (bs, C, Hp, Wp), jnp.float32),
        'xz': jax.random.normal(ks[13], (bs, C, Hp, Wp), jnp.float32),
        'yz': jax.random.normal(ks[14], (bs, C, Hp, Wp), jnp.float32),
    }

    out = equi_grasp_forward(query_pos, c, params, use_pallas=True)
    out = jax.block_until_ready(out)

    ref = equi_grasp_forward(query_pos, c, params, use_pallas=False)
    ref = jax.block_until_ready(ref)

    # Tolerance rationale: both the fused kernel and the op-by-op reference
    # evaluate their f32 matmul chains at the backend's default (reduced,
    # bf16-pass) MXU precision but with different associativity; with softmax
    # logits of magnitude O(10) this yields few-e-3 absolute differences in the
    # final output (4e-3 max observed previously), so 1e-2 gives >2x headroom
    # while still bounding the kernel to ~0.25% of the output's dynamic range.
    np.testing.assert_allclose(np.asarray(out), np.asarray(ref),
                               rtol=1e-2, atol=1e-2)
    assert out.shape == (bs, ns, C)
    print("KERNEL_OK")
</pallas_src>

<mosaic_0001>
module attributes {stable_mosaic.version = 11 : i64} {
  func.func @_attn_kernel(%arg0: i32, %arg1: memref<16x256xf32, #tpu.memory_space<vmem>>, %arg2: memref<16x25x256xf32, #tpu.memory_space<vmem>>, %arg3: memref<32x16xf32, #tpu.memory_space<vmem>>, %arg4: memref<32x1xf32, #tpu.memory_space<vmem>>, %arg5: memref<16x32xf32, #tpu.memory_space<vmem>>, %arg6: memref<25x32xf32, #tpu.memory_space<vmem>>, %arg7: memref<32x16xf32, #tpu.memory_space<vmem>>, %arg8: memref<32x1xf32, #tpu.memory_space<vmem>>, %arg9: memref<16x32xf32, #tpu.memory_space<vmem>>, %arg10: memref<16x1xf32, #tpu.memory_space<vmem>>, %arg11: memref<16x256xf32, #tpu.memory_space<vmem>>) attributes {dimension_semantics = [#tpu.dimension_semantics<parallel>], iteration_bounds = array<i64: 2>, scalar_prefetch = 0 : i64, scratch_operands = 0 : i64, tpu.core_type = #tpu.core_type<tc>, window_params = [{transform_indices = @transform_0, window_bounds = array<i64: 16, 256>}, {transform_indices = @transform_1, window_bounds = array<i64: 16, 25, 256>}, {pipeline_mode = #tpu.pipeline_mode<synchronous>, transform_indices = @transform_2, window_bounds = array<i64: 32, 16>}, {pipeline_mode = #tpu.pipeline_mode<synchronous>, transform_indices = @transform_3, window_bounds = array<i64: 32, 1>}, {pipeline_mode = #tpu.pipeline_mode<synchronous>, transform_indices = @transform_4, window_bounds = array<i64: 16, 32>}, {pipeline_mode = #tpu.pipeline_mode<synchronous>, transform_indices = @transform_5, window_bounds = array<i64: 25, 32>}, {pipeline_mode = #tpu.pipeline_mode<synchronous>, transform_indices = @transform_6, window_bounds = array<i64: 32, 16>}, {pipeline_mode = #tpu.pipeline_mode<synchronous>, transform_indices = @transform_7, window_bounds = array<i64: 32, 1>}, {pipeline_mode = #tpu.pipeline_mode<synchronous>, transform_indices = @transform_8, window_bounds = array<i64: 16, 32>}, {pipeline_mode = #tpu.pipeline_mode<synchronous>, transform_indices = @transform_9, window_bounds = array<i64: 16, 1>}, {transform_indices = @transform_10, window_bounds = array<i64: 16, 256>}]} {
    %c0 = arith.constant 0 : index
    %c0_0 = arith.constant 0 : index
    %0 = vector.load %arg1[%c0, %c0_0] : memref<16x256xf32, #tpu.memory_space<vmem>>, vector<16x256xf32>
    %c0_1 = arith.constant 0 : index
    %c0_2 = arith.constant 0 : index
    %c0_3 = arith.constant 0 : index
    %1 = vector.load %arg2[%c0_1, %c0_2, %c0_3] : memref<16x25x256xf32, #tpu.memory_space<vmem>>, vector<16x25x256xf32>
    %c0_4 = arith.constant 0 : index
    %c0_5 = arith.constant 0 : index
    %2 = vector.load %arg3[%c0_4, %c0_5] : memref<32x16xf32, #tpu.memory_space<vmem>>, vector<32x16xf32>
    %cst = arith.constant dense<0.000000e+00> : vector<32x256xf32>
    %3 = tpu.matmul %2, %0, %cst {dimension_numbers = #tpu.dot_dimension_numbers<[1], [0], [0], [1], [0, 0, 1, 1], [], []>} : vector<32x16xf32>, vector<16x256xf32>, vector<32x256xf32> -> vector<32x256xf32>
    %c0_6 = arith.constant 0 : index
    %c0_7 = arith.constant 0 : index
    %4 = vector.load %arg4[%c0_6, %c0_7] : memref<32x1xf32, #tpu.memory_space<vmem>>, vector<32x1xf32>
    %5 = vector.broadcast %4 : vector<32x1xf32> to vector<32x256xf32>
    %6 = arith.addf %3, %5 : vector<32x256xf32>
    %c0_8 = arith.constant 0 : index
    %c0_9 = arith.constant 0 : index
    %7 = vector.load %arg5[%c0_8, %c0_9] : memref<16x32xf32, #tpu.memory_space<vmem>>, vector<16x32xf32>
    %cst_10 = arith.constant dense<0.000000e+00> : vector<16x256xf32>
    %8 = tpu.matmul %7, %6, %cst_10 {dimension_numbers = #tpu.dot_dimension_numbers<[1], [0], [0], [1], [0, 0, 1, 1], [], []>} : vector<16x32xf32>, vector<32x256xf32>, vector<16x256xf32> -> vector<16x256xf32>
    %9 = vector.shape_cast %8 : vector<16x256xf32> to vector<16x1x256xf32>
    %10 = vector.broadcast %9 : vector<16x1x256xf32> to vector<16x25x256xf32>
    %11 = arith.mulf %1, %10 : vector<16x25x256xf32>
    %cst_11 = arith.constant dense<0.000000e+00> : vector<25x256xf32>
    %12 = vector.multi_reduction <add>, %11, %cst_11 [0] : vector<16x25x256xf32> to vector<25x256xf32>
    %c0_12 = arith.constant 0 : index
    %c0_13 = arith.constant 0 : index
    %13 = vector.load %arg6[%c0_12, %c0_13] : memref<25x32xf32, #tpu.memory_space<vmem>>, vector<25x32xf32>
    %cst_14 = arith.constant dense<0.000000e+00> : vector<25x256xf32>
    %14 = tpu.matmul %13, %6, %cst_14 {dimension_numbers = #tpu.dot_dimension_numbers<[1], [0], [0], [1], [0, 0, 1, 1], [], []>} : vector<25x32xf32>, vector<32x256xf32>, vector<25x256xf32> -> vector<25x256xf32>
    %15 = arith.addf %12, %14 : vector<25x256xf32>
    %cst_15 = arith.constant dense<0xFF800000> : vector<256xf32>
    %16 = vector.multi_reduction <maximumf>, %15, %cst_15 [0] : vector<25x256xf32> to vector<256xf32>
    %17 = vector.shape_cast %16 : vector<256xf32> to vector<1x256xf32>
    %18 = vector.broadcast %17 : vector<1x256xf32> to vector<25x256xf32>
    %19 = arith.subf %15, %18 : vector<25x256xf32>
    %20 = math.exp %19 : vector<25x256xf32>
    %cst_16 = arith.constant dense<0.000000e+00> : vector<256xf32>
    %21 = vector.multi_reduction <add>, %20, %cst_16 [0] : vector<25x256xf32> to vector<256xf32>
    %22 = vector.shape_cast %21 : vector<256xf32> to vector<1x256xf32>
    %23 = vector.broadcast %22 : vector<1x256xf32> to vector<25x256xf32>
    %24 = arith.divf %20, %23 : vector<25x256xf32>
    %25 = vector.shape_cast %24 : vector<25x256xf32> to vector<1x25x256xf32>
    %26 = vector.broadcast %25 : vector<1x25x256xf32> to vector<16x25x256xf32>
    %27 = arith.mulf %26, %1 : vector<16x25x256xf32>
    %cst_17 = arith.constant dense<0.000000e+00> : vector<16x256xf32>
    %28 = vector.multi_reduction <add>, %27, %cst_17 [1] : vector<16x25x256xf32> to vector<16x256xf32>
    %c0_18 = arith.constant 0 : index
    %c0_19 = arith.constant 0 : index
    %29 = vector.load %arg7[%c0_18, %c0_19] : memref<32x16xf32, #tpu.memory_space<vmem>>, vector<32x16xf32>
    %cst_20 = arith.constant dense<0.000000e+00> : vector<32x256xf32>
    %30 = tpu.matmul %29, %28, %cst_20 {dimension_numbers = #tpu.dot_dimension_numbers<[1], [0], [0], [1], [0, 0, 1, 1], [], []>} : vector<32x16xf32>, vector<16x256xf32>, vector<32x256xf32> -> vector<32x256xf32>
    %c0_21 = arith.constant 0 : index
    %c0_22 = arith.constant 0 : index
    %31 = vector.load %arg8[%c0_21, %c0_22] : memref<32x1xf32, #tpu.memory_space<vmem>>, vector<32x1xf32>
    %32 = vector.broadcast %31 : vector<32x1xf32> to vector<32x256xf32>
    %33 = arith.addf %30, %32 : vector<32x256xf32>
    %c0_23 = arith.constant 0 : index
    %c0_24 = arith.constant 0 : index
    %34 = vector.load %arg9[%c0_23, %c0_24] : memref<16x32xf32, #tpu.memory_space<vmem>>, vector<16x32xf32>
    %cst_25 = arith.constant dense<0.000000e+00> : vector<16x256xf32>
    %35 = tpu.matmul %34, %33, %cst_25 {dimension_numbers = #tpu.dot_dimension_numbers<[1], [0], [0], [1], [0, 0, 1, 1], [], []>} : vector<16x32xf32>, vector<32x256xf32>, vector<16x256xf32> -> vector<16x256xf32>
    %c0_26 = arith.constant 0 : index
    %c0_27 = arith.constant 0 : index
    %36 = vector.load %arg10[%c0_26, %c0_27] : memref<16x1xf32, #tpu.memory_space<vmem>>, vector<16x1xf32>
    %37 = vector.broadcast %36 : vector<16x1xf32> to vector<16x256xf32>
    %38 = arith.addf %35, %37 : vector<16x256xf32>
    %39 = arith.addf %38, %0 : vector<16x256xf32>
    %c0_28 = arith.constant 0 : index
    %c0_29 = arith.constant 0 : index
    %40 = vector.load %arg11[%c0_28, %c0_29] : memref<16x256xf32, #tpu.memory_space<vmem>>, vector<16x256xf32>
    tpu.vector_store %arg11[%c0_28, %c0_29], %39 {strides = array<i32>} : memref<16x256xf32, #tpu.memory_space<vmem>>, vector<16x256xf32>,
    return
  }
  func.func @transform_0(%arg0: i32) -> (i32, i32) {
    %c0_i32 = arith.constant 0 : i32
    %c0_i32_0 = arith.constant 0 : i32
    return %c0_i32, %arg0 : i32, i32
  }
  func.func @transform_1(%arg0: i32) -> (i32, i32, i32) {
    %c0_i32 = arith.constant 0 : i32
    %c0_i32_0 = arith.constant 0 : i32
    %c0_i32_1 = arith.constant 0 : i32
    return %c0_i32, %c0_i32_0, %arg0 : i32, i32, i32
  }
  func.func @transform_2(%arg0: i32) -> (i32, i32) {
    %c0_i32 = arith.constant 0 : i32
    %c0_i32_0 = arith.constant 0 : i32
    %c0_i32_1 = arith.constant 0 : i32
    return %c0_i32, %c0_i32_0 : i32, i32
  }
  func.func @transform_3(%arg0: i32) -> (i32, i32) {
    %c0_i32 = arith.constant 0 : i32
    %c0_i32_0 = arith.constant 0 : i32
    %c0_i32_1 = arith.constant 0 : i32
    return %c0_i32, %c0_i32_0 : i32, i32
  }
  func.func @transform_4(%arg0: i32) -> (i32, i32) {
    %c0_i32 = arith.constant 0 : i32
    %c0_i32_0 = arith.constant 0 : i32
    %c0_i32_1 = arith.constant 0 : i32
    return %c0_i32, %c0_i32_0 : i32, i32
  }
  func.func @transform_5(%arg0: i32) -> (i32, i32) {
    %c0_i32 = arith.constant 0 : i32
    %c0_i32_0 = arith.constant 0 : i32
    %c0_i32_1 = arith.constant 0 : i32
    return %c0_i32, %c0_i32_0 : i32, i32
  }
  func.func @transform_6(%arg0: i32) -> (i32, i32) {
    %c0_i32 = arith.constant 0 : i32
    %c0_i32_0 = arith.constant 0 : i32
    %c0_i32_1 = arith.constant 0 : i32
    return %c0_i32, %c0_i32_0 : i32, i32
  }
  func.func @transform_7(%arg0: i32) -> (i32, i32) {
    %c0_i32 = arith.constant 0 : i32
    %c0_i32_0 = arith.constant 0 : i32
    %c0_i32_1 = arith.constant 0 : i32
    return %c0_i32, %c0_i32_0 : i32, i32
  }
  func.func @transform_8(%arg0: i32) -> (i32, i32) {
    %c0_i32 = arith.constant 0 : i32
    %c0_i32_0 = arith.constant 0 : i32
    %c0_i32_1 = arith.constant 0 : i32
    return %c0_i32, %c0_i32_0 : i32, i32
  }
  func.func @transform_9(%arg0: i32) -> (i32, i32) {
    %c0_i32 = arith.constant 0 : i32
    %c0_i32_0 = arith.constant 0 : i32
    %c0_i32_1 = arith.constant 0 : i32
    return %c0_i32, %c0_i32_0 : i32, i32
  }
  func.func @transform_10(%arg0: i32) -> (i32, i32) {
    %c0_i32 = arith.constant 0 : i32
    %c0_i32_0 = arith.constant 0 : i32
    return %c0_i32, %arg0 : i32, i32
  }
}

</mosaic_0001>

<llo_original>
// kernel: tpu_custom_call.1
$region0: #{tpu_custom_call.1}
  #allocation0 [shape = 'u32[]', space=smem, size = 0x4, offset = 0x4, fixed_abs, tag = 'smem constant byte address 0x4 - core index']
  #allocation1 [shape = 'u32[144,128]{1,0:T(1,128)}', space=vmem, size = 0x12000, scoped, tag = 'internal scratch']
  %s0 = inlined_call_operand.vmem [shape: f32[16,512], index: 0, kind: input, shape index: {}]
  %s1 = inlined_call_operand.vmem [shape: f32[16,25,512], index: 1, kind: input, shape index: {}]
  %s2 = inlined_call_operand.vmem [shape: f32[32,16], index: 2, kind: input, shape index: {}]
  %s3 = inlined_call_operand.vmem [shape: f32[32,1], index: 3, kind: input, shape index: {}]
  %s4 = inlined_call_operand.vmem [shape: f32[16,32], index: 4, kind: input, shape index: {}]
  %s5 = inlined_call_operand.vmem [shape: f32[25,32], index: 5, kind: input, shape index: {}]
  %s6 = inlined_call_operand.vmem [shape: f32[32,16], index: 6, kind: input, shape index: {}]
  %s7 = inlined_call_operand.vmem [shape: f32[32,1], index: 7, kind: input, shape index: {}]
  %s8 = inlined_call_operand.vmem [shape: f32[16,32], index: 8, kind: input, shape index: {}]
  %s9 = inlined_call_operand.vmem [shape: f32[16,1], index: 9, kind: input, shape index: {}]
  %s10 = inlined_call_operand.hbm [shape: f32[16,512], index: 10, kind: output, shape index: {}]
  %s11 = sld [smem:[#allocation0]]
  $region119: #{tpu_custom_call.1} parent=0
    _
  %s13 = ssub.s32 1, %s11
  %s14 = scalar_select 0, %s13, %s11
  $region1: #{tpu_custom_call.1} parent=0
    #allocation2 [shape = 'u8[32768]{0}', space=vmem, size = 0x8000, scoped, tag = 'input window, operand 0']
    #allocation3 [shape = 'u8[1048576]{0}', space=vmem, size = 0x100000, scoped, tag = 'input window, operand 1']
    #allocation4 [shape = 'u8[32768]{0}', space=vmem, size = 0x8000, scoped, tag = 'output window, operand 0']
    #allocation5 [shape = 's32[2]{0}', space=sflag, size = 0x8, scoped, tag = 'scoped memory for tpu_custom_call.1']
    %15 = vsyncpa [#allocation5], 0
    %s16 = scalar_lea.sflag [#allocation5], 1
    %17 = vsyncpa %s16, 0
    loop: start=0, step=1, limit=4
    $region2: #{tpu_custom_call.1} parent=1 // loop_pre_header
      _
    $region3: #{tpu_custom_call.1} parent=1 // loop_header
      %s19 = sphi 0, %s23
      %p20 = scmp.ge.s32.totalorder %s19, 4
      %s29 = sphi 0, %s31
      %s32 = sphi 0, %s29
      %s33 = sphi 0, %s32
      %s49 = sphi 0, %s33
      %s55 = sphi 0, %s57
      %s58 = sphi 0, %s55
      %s59 = sphi 0, %s58
      %s75 = sphi 0, %s59
      %s79 = sphi 0, %s79
      %s81 = sphi 0, %s79
      %s82 = sphi 0, %s81
      %s96 = sphi 0, %s82
      %s100 = sphi 0, %s100
      %s102 = sphi 0, %s100
      %s103 = sphi 0, %s102
      %s117 = sphi 0, %s103
      %s121 = sphi 0, %s121
      %s123 = sphi 0, %s121
      %s124 = sphi 0, %s123
      %s138 = sphi 0, %s124
      %s142 = sphi 0, %s142
      %s144 = sphi 0, %s142
      %s145 = sphi 0, %s144
      %s159 = sphi 0, %s145
      %s163 = sphi 0, %s163
      %s165 = sphi 0, %s163
      %s166 = sphi 0, %s165
      %s180 = sphi 0, %s166
      %s184 = sphi 0, %s184
      %s186 = sphi 0, %s184
      %s187 = sphi 0, %s186
      %s201 = sphi 0, %s187
      %s205 = sphi 0, %s205
      %s207 = sphi 0, %s205
      %s208 = sphi 0, %s207
      %s222 = sphi 0, %s208
      %s226 = sphi 0, %s226
      %s228 = sphi 0, %s226
      %s229 = sphi 0, %s228
      %s243 = sphi 0, %s229
      %s249 = sphi 0, %s251
      %s252 = sphi 0, %s249
      %s253 = sphi 0, %s252
      %s269 = sphi 0, %s253
    $region4: #{tpu_custom_call.1} parent=1 // loop_header_branch
      %22 = sbr.rel (%p20) target = $region8
    $region5: #{tpu_custom_call.1} parent=1 // loop_body
      %s24 = ssub.s32 %s19, 1
      %s25 = ssub.s32 %s19, 2
      %s26 = sadd.s32 %s19, 1
      %s27 = ssub.s32 %s19, %s26
      %p28 = scmp.eq.s32.totalorder %s27, 0
      %s30 = sadd.s32 %s29, 1
      %s31 = scalar_select %p28, %s29, %s30
      %p34 = pneg %p28
      %p35 = scmp.eq.s32.totalorder %s19, 1
      %p36 = por %p34, %p35
      %p37 = scmp.ne.s32.totalorder %s29, %s32
      %p38 = scmp.eq.s32.totalorder %s19, 0
      %p39 = por %p37, %p38
      %p40 = scmp.ne.s32.totalorder %s29, %s32
      %p41 = scmp.eq.s32.totalorder %s24, 1
      %p42 = por %p40, %p41
      %p43 = scmp.ne.s32.totalorder %s32, %s33
      %p44 = scmp.eq.s32.totalorder %s24, 0
      %p45 = por %p43, %p44
      %p46 = scmp.ne.s32.totalorder %s32, %s33
      %p47 = scmp.eq.s32.totalorder %s25, 1
      %p48 = por %p46, %p47
      %p50 = scmp.ne.s32.totalorder %s33, %s49
      %p51 = scmp.eq.s32.totalorder %s25, 0
      %p52 = por %p50, %p51
      %s53 = ssub.s32 %s19, %s26
      %p54 = scmp.eq.s32.totalorder %s53, 0
      %s56 = sadd.s32 %s55, 1
      %s57 = scalar_select %p54, %s55, %s56
      %p60 = pneg %p54
      %p61 = scmp.eq.s32.totalorder %s19, 1
      %p62 = por %p60, %p61
      %p63 = scmp.ne.s32.totalorder %s55, %s58
      %p64 = scmp.eq.s32.totalorder %s19, 0
      %p65 = por %p63, %p64
      %p66 = scmp.ne.s32.totalorder %s55, %s58
      %p67 = scmp.eq.s32.totalorder %s24, 1
      %p68 = por %p66, %p67
      %p69 = scmp.ne.s32.totalorder %s58, %s59
      %p70 = scmp.eq.s32.totalorder %s24, 0
      %p71 = por %p69, %p70
      %p72 = scmp.ne.s32.totalorder %s58, %s59
      %p73 = scmp.eq.s32.totalorder %s25, 1
      %p74 = por %p72, %p73
      %p76 = scmp.ne.s32.totalorder %s59, %s75
      %p77 = scmp.eq.s32.totalorder %s25, 0
      %p78 = por %p76, %p77
      %s80 = sadd.s32 %s79, 1
      %p83 = scmp.eq.s32.totalorder %s19, 1
      %p84 = scmp.ne.s32.totalorder %s79, %s81
      %p85 = scmp.eq.s32.totalorder %s19, 0
      %p86 = por %p84, %p85
      %p87 = scmp.ne.s32.totalorder %s79, %s81
      %p88 = scmp.eq.s32.totalorder %s24, 1
      %p89 = por %p87, %p88
      %p90 = scmp.ne.s32.totalorder %s81, %s82
      %p91 = scmp.eq.s32.totalorder %s24, 0
      %p92 = por %p90, %p91
      %p93 = scmp.ne.s32.totalorder %s81, %s82
      %p94 = scmp.eq.s32.totalorder %s25, 1
      %p95 = por %p93, %p94
      %p97 = scmp.ne.s32.totalorder %s82, %s96
      %p98 = scmp.eq.s32.totalorder %s25, 0
      %p99 = por %p97, %p98
      %s101 = sadd.s32 %s100, 1
      %p104 = scmp.eq.s32.totalorder %s19, 1
      %p105 = scmp.ne.s32.totalorder %s100, %s102
      %p106 = scmp.eq.s32.totalorder %s19, 0
      %p107 = por %p105, %p106
      %p108 = scmp.ne.s32.totalorder %s100, %s102
      %p109 = scmp.eq.s32.totalorder %s24, 1
      %p110 = por %p108, %p109
      %p111 = scmp.ne.s32.totalorder %s102, %s103
      %p112 = scmp.eq.s32.totalorder %s24, 0
      %p113 = por %p111, %p112
      %p114 = scmp.ne.s32.totalorder %s102, %s103
      %p115 = scmp.eq.s32.totalorder %s25, 1
      %p116 = por %p114, %p115
      %p118 = scmp.ne.s32.totalorder %s103, %s117
      %p119 = scmp.eq.s32.totalorder %s25, 0
      %p120 = por %p118, %p119
      %s122 = sadd.s32 %s121, 1
      %p125 = scmp.eq.s32.totalorder %s19, 1
      %p126 = scmp.ne.s32.totalorder %s121, %s123
      %p127 = scmp.eq.s32.totalorder %s19, 0
      %p128 = por %p126, %p127
      %p129 = scmp.ne.s32.totalorder %s121, %s123
      %p130 = scmp.eq.s32.totalorder %s24, 1
      %p131 = por %p129, %p130
      %p132 = scmp.ne.s32.totalorder %s123, %s124
      %p133 = scmp.eq.s32.totalorder %s24, 0
      %p134 = por %p132, %p133
      %p135 = scmp.ne.s32.totalorder %s123, %s124
      %p136 = scmp.eq.s32.totalorder %s25, 1
      %p137 = por %p135, %p136
      %p139 = scmp.ne.s32.totalorder %s124, %s138
      %p140 = scmp.eq.s32.totalorder %s25, 0
      %p141 = por %p139, %p140
      %s143 = sadd.s32 %s142, 1
      %p146 = scmp.eq.s32.totalorder %s19, 1
      %p147 = scmp.ne.s32.totalorder %s142, %s144
      %p148 = scmp.eq.s32.totalorder %s19, 0
      %p149 = por %p147, %p148
      %p150 = scmp.ne.s32.totalorder %s142, %s144
      %p151 = scmp.eq.s32.totalorder %s24, 1
      %p152 = por %p150, %p151
      %p153 = scmp.ne.s32.totalorder %s144, %s145
      %p154 = scmp.eq.s32.totalorder %s24, 0
      %p155 = por %p153, %p154
      %p156 = scmp.ne.s32.totalorder %s144, %s145
      %p157 = scmp.eq.s32.totalorder %s25, 1
      %p158 = por %p156, %p157
      %p160 = scmp.ne.s32.totalorder %s145, %s159
      %p161 = scmp.eq.s32.totalorder %s25, 0
      %p162 = por %p160, %p161
      %s164 = sadd.s32 %s163, 1
      %p167 = scmp.eq.s32.totalorder %s19, 1
      %p168 = scmp.ne.s32.totalorder %s163, %s165
      %p169 = scmp.eq.s32.totalorder %s19, 0
      %p170 = por %p168, %p169
      %p171 = scmp.ne.s32.totalorder %s163, %s165
      %p172 = scmp.eq.s32.totalorder %s24, 1
      %p173 = por %p171, %p172
      %p174 = scmp.ne.s32.totalorder %s165, %s166
      %p175 = scmp.eq.s32.totalorder %s24, 0
      %p176 = por %p174, %p175
      %p177 = scmp.ne.s32.totalorder %s165, %s166
      %p178 = scmp.eq.s32.totalorder %s25, 1
      %p179 = por %p177, %p178
      %p181 = scmp.ne.s32.totalorder %s166, %s180
      %p182 = scmp.eq.s32.totalorder %s25, 0
      %p183 = por %p181, %p182
      %s185 = sadd.s32 %s184, 1
      %p188 = scmp.eq.s32.totalorder %s19, 1
      %p189 = scmp.ne.s32.totalorder %s184, %s186
      %p190 = scmp.eq.s32.totalorder %s19, 0
      %p191 = por %p189, %p190
      %p192 = scmp.ne.s32.totalorder %s184, %s186
      %p193 = scmp.eq.s32.totalorder %s24, 1
      %p194 = por %p192, %p193
      %p195 = scmp.ne.s32.totalorder %s186, %s187
      %p196 = scmp.eq.s32.totalorder %s24, 0
      %p197 = por %p195, %p196
      %p198 = scmp.ne.s32.totalorder %s186, %s187
      %p199 = scmp.eq.s32.totalorder %s25, 1
      %p200 = por %p198, %p199
      %p202 = scmp.ne.s32.totalorder %s187, %s201
      %p203 = scmp.eq.s32.totalorder %s25, 0
      %p204 = por %p202, %p203
      %s206 = sadd.s32 %s205, 1
      %p209 = scmp.eq.s32.totalorder %s19, 1
      %p210 = scmp.ne.s32.totalorder %s205, %s207
      %p211 = scmp.eq.s32.totalorder %s19, 0
      %p212 = por %p210, %p211
      %p213 = scmp.ne.s32.totalorder %s205, %s207
      %p214 = scmp.eq.s32.totalorder %s24, 1
      %p215 = por %p213, %p214
      %p216 = scmp.ne.s32.totalorder %s207, %s208
      %p217 = scmp.eq.s32.totalorder %s24, 0
      %p218 = por %p216, %p217
      %p219 = scmp.ne.s32.totalorder %s207, %s208
      %p220 = scmp.eq.s32.totalorder %s25, 1
      %p221 = por %p219, %p220
      %p223 = scmp.ne.s32.totalorder %s208, %s222
      %p224 = scmp.eq.s32.totalorder %s25, 0
      %p225 = por %p223, %p224
      %s227 = sadd.s32 %s226, 1
      %p230 = scmp.eq.s32.totalorder %s19, 1
      %p231 = scmp.ne.s32.totalorder %s226, %s228
      %p232 = scmp.eq.s32.totalorder %s19, 0
      %p233 = por %p231, %p232
      %p234 = scmp.ne.s32.totalorder %s226, %s228
      %p235 = scmp.eq.s32.totalorder %s24, 1
      %p236 = por %p234, %p235
      %p237 = scmp.ne.s32.totalorder %s228, %s229
      %p238 = scmp.eq.s32.totalorder %s24, 0
      %p239 = por %p237, %p238
      %p240 = scmp.ne.s32.totalorder %s228, %s229
      %p241 = scmp.eq.s32.totalorder %s25, 1
      %p242 = por %p240, %p241
      %p244 = scmp.ne.s32.totalorder %s229, %s243
      %p245 = scmp.eq.s32.totalorder %s25, 0
      %p246 = por %p244, %p245
      %s247 = ssub.s32 %s19, %s26
      %p248 = scmp.eq.s32.totalorder %s247, 0
      %s250 = sadd.s32 %s249, 1
      %s251 = scalar_select %p248, %s249, %s250
      %p254 = pneg %p248
      %p255 = scmp.eq.s32.totalorder %s19, 1
      %p256 = por %p254, %p255
      %p257 = scmp.ne.s32.totalorder %s249, %s252
      %p258 = scmp.eq.s32.totalorder %s19, 0
      %p259 = por %p257, %p258
      %p260 = scmp.ne.s32.totalorder %s249, %s252
      %p261 = scmp.eq.s32.totalorder %s24, 1
      %p262 = por %p260, %p261
      %p263 = scmp.ne.s32.totalorder %s252, %s253
      %p264 = scmp.eq.s32.totalorder %s24, 0
      %p265 = por %p263, %p264
      %p266 = scmp.ne.s32.totalorder %s252, %s253
      %p267 = scmp.eq.s32.totalorder %s25, 1
      %p268 = por %p266, %p267
      %p270 = scmp.ne.s32.totalorder %s253, %s269
      %p271 = scmp.eq.s32.totalorder %s25, 0
      %p272 = por %p270, %p271
      %p273 = scmp.le.s32.totalorder 1, %s19
      %p274 = scmp.lt.s32.totalorder %s19, 3
      %p275 = pnand %p273, %p274
      %p276 = pneg %p275
      // Predicated region
      $region9: #{tpu_custom_call.1} parent=5 // pred_check
        _
      $region10: #{tpu_custom_call.1} parent=5 // pred_check_branch
        %278 = sbr.rel (%p275) target = $region12
      $region11: #{tpu_custom_call.1} parent=5 // pred_region
        %s279 = ssub.s32 %s19, 1
        // Predicated region
        $region13: #{tpu_custom_call.1} parent=11 // pred_check
          %p280 = pneg %p92
        $region14: #{tpu_custom_call.1} parent=11 // pred_check_branch
          %282 = sbr.rel (%p280) target = $region16
        $region15: #{tpu_custom_call.1} parent=11 // pred_region
          _
        $region16: #{tpu_custom_call.1} parent=11 // pred_fallthru
          _
        // Predicated region
        $region17: #{tpu_custom_call.1} parent=11 // pred_check
          %p283 = pneg %p113
        $region18: #{tpu_custom_call.1} parent=11 // pred_check_branch
          %285 = sbr.rel (%p283) target = $region20
        $region19: #{tpu_custom_call.1} parent=11 // pred_region
          _
        $region20: #{tpu_custom_call.1} parent=11 // pred_fallthru
          _
        // Predicated region
        $region21: #{tpu_custom_call.1} parent=11 // pred_check
          %p286 = pneg %p134
        $region22: #{tpu_custom_call.1} parent=11 // pred_check_branch
          %288 = sbr.rel (%p286) target = $region24
        $region23: #{tpu_custom_call.1} parent=11 // pred_region
          _
        $region24: #{tpu_custom_call.1} parent=11 // pred_fallthru
          _
        // Predicated region
        $region25: #{tpu_custom_call.1} parent=11 // pred_check
          %p289 = pneg %p155
        $region26: #{tpu_custom_call.1} parent=11 // pred_check_branch
          %291 = sbr.rel (%p289) target = $region28
        $region27: #{tpu_custom_call.1} parent=11 // pred_region
          _
        $region28: #{tpu_custom_call.1} parent=11 // pred_fallthru
          _
        // Predicated region
        $region29: #{tpu_custom_call.1} parent=11 // pred_check
          %p292 = pneg %p176
        $region30: #{tpu_custom_call.1} parent=11 // pred_check_branch
          %294 = sbr.rel (%p292) target = $region32
        $region31: #{tpu_custom_call.1} parent=11 // pred_region
          _
        $region32: #{tpu_custom_call.1} parent=11 // pred_fallthru
          _
        // Predicated region
        $region33: #{tpu_custom_call.1} parent=11 // pred_check
          %p295 = pneg %p197
        $region34: #{tpu_custom_call.1} parent=11 // pred_check_branch
          %297 = sbr.rel (%p295) target = $region36
        $region35: #{tpu_custom_call.1} parent=11 // pred_region
          _
        $region36: #{tpu_custom_call.1} parent=11 // pred_fallthru
          _
        // Predicated region
        $region37: #{tpu_custom_call.1} parent=11 // pred_check
          %p298 = pneg %p218
        $region38: #{tpu_custom_call.1} parent=11 // pred_check_branch
          %300 = sbr.rel (%p298) target = $region40
        $region39: #{tpu_custom_call.1} parent=11 // pred_region
          _
        $region40: #{tpu_custom_call.1} parent=11 // pred_fallthru
          _
        // Predicated region
        $region41: #{tpu_custom_call.1} parent=11 // pred_check
          %p301 = pneg %p239
        $region42: #{tpu_custom_call.1} parent=11 // pred_check_branch
          %303 = sbr.rel (%p301) target = $region44
        $region43: #{tpu_custom_call.1} parent=11 // pred_region
          _
        $region44: #{tpu_custom_call.1} parent=11 // pred_fallthru
          _
      $region12: #{tpu_custom_call.1} parent=5 // pred_fallthru
        _
      %p304 = scmp.lt.s32.totalorder %s19, 2
      // Predicated region
      $region45: #{tpu_custom_call.1} parent=5 // pred_check
        %p305 = pneg %p304
      $region46: #{tpu_custom_call.1} parent=5 // pred_check_branch
        %307 = sbr.rel (%p305) target = $region48
      $region47: #{tpu_custom_call.1} parent=5 // pred_region
        // Predicated region
        $region49: #{tpu_custom_call.1} parent=47 // pred_check
          %p308 = pneg %p39
        $region50: #{tpu_custom_call.1} parent=47 // pred_check_branch
          %310 = sbr.rel (%p308) target = $region52
        $region51: #{tpu_custom_call.1} parent=47 // pred_region
          %s311 = sand.u32 %s29, 1
          %s312 = sand.u32 %s29, 1
          %s313 = smul.addr %s312, 32
          %s314 = scalar_lea.vmem [#allocation2], %s313
          %s315 = smul.u32 2, %s19
          %s316 = smul.addr %s315, 8
          %s317 = scalar_lea.vmem %s0, %s316
          // Predicated region
          $region53: #{tpu_custom_call.1} parent=51 // pred_check
            _
          $region54: #{tpu_custom_call.1} parent=51 // pred_check_branch
            %319 = sbr.rel (0) target = $region56
          $region55: #{tpu_custom_call.1} parent=51 // pred_region
            // Predicated region
            $region57: #{tpu_custom_call.1} parent=55 // pred_check
              _
            $region58: #{tpu_custom_call.1} parent=55 // pred_check_branch
              %321 = sbr.rel (0) target = $region60
            $region59: #{tpu_custom_call.1} parent=55 // pred_region
              loop: start=0, step=1, limit=1
              $region61: #{tpu_custom_call.1} parent=59 // loop_pre_header
                _
              $region62: #{tpu_custom_call.1} parent=59 // loop_header
                %s323 = sphi 0, %s327
                %p324 = scmp.ge.s32.totalorder %s323, 1
                %s328 = sphi %s317, %s317
                %s329 = sphi %s314, %s314
              $region63: #{tpu_custom_call.1} parent=59 // loop_header_branch
                %326 = sbr.rel (%p324) target = $region67
              $region64: #{tpu_custom_call.1} parent=59 // loop_body
                %v330 = vld [vmem:[%s328] sm:$0xff]
                %331 = vst [vmem:[%s329] sm:$0xff] %v330
                %v332 = vld [vmem:[%s328 + $0x8] sm:$0xff]
                %333 = vst [vmem:[%s329 + $0x8] sm:$0xff] %v332
                %v334 = vld [vmem:[%s328 + $0x20] sm:$0xff]
                %335 = vst [vmem:[%s329 + $0x10] sm:$0xff] %v334
                %v336 = vld [vmem:[%s328 + $0x28] sm:$0xff]
                %337 = vst [vmem:[%s329 + $0x18] sm:$0xff] %v336
              $region65: #{tpu_custom_call.1} parent=59 // loop_footer
                %s327 = sadd.s32 1, %s323
              $region66: #{tpu_custom_call.1} parent=59 // loop_footer_branch
                %322 = sbr.rel target = $region62
              $region67: #{tpu_custom_call.1} parent=59 // loop_exit
                _
            $region60: #{tpu_custom_call.1} parent=55 // pred_fallthru
              _
            // Predicated region
            $region68: #{tpu_custom_call.1} parent=55 // pred_check
              _
            $region69: #{tpu_custom_call.1} parent=55 // pred_check_branch
              %339 = sbr.rel target = $region71
            $region70: #{tpu_custom_call.1} parent=55 // pred_region
              _
            $region71: #{tpu_custom_call.1} parent=55 // pred_fallthru
              _
          $region56: #{tpu_custom_call.1} parent=51 // pred_fallthru
            _
          %340 = vnop
        $region52: #{tpu_custom_call.1} parent=47 // pred_fallthru
          _
        // Predicated region
        $region72: #{tpu_custom_call.1} parent=47 // pred_check
          %p341 = pneg %p65
        $region73: #{tpu_custom_call.1} parent=47 // pred_check_branch
          %343 = sbr.rel (%p341) target = $region75
        $region74: #{tpu_custom_call.1} parent=47 // pred_region
          %s344 = sand.u32 %s55, 1
          %s345 = sand.u32 %s55, 1
          %s346 = smul.addr %s345, 1024
          %s347 = scalar_lea.vmem [#allocation3], %s346
          %s348 = smul.u32 2, %s19
          %s349 = smul.addr %s348, 8
          %s350 = scalar_lea.vmem %s1, %s349
          // Predicated region
          $region76: #{tpu_custom_call.1} parent=74 // pred_check
            _
          $region77: #{tpu_custom_call.1} parent=74 // pred_check_branch
            %352 = sbr.rel (0) target = $region79
          $region78: #{tpu_custom_call.1} parent=74 // pred_region
            // Predicated region
            $region80: #{tpu_custom_call.1} parent=78 // pred_check
              _
            $region81: #{tpu_custom_call.1} parent=78 // pred_check_branch
              %354 = sbr.rel (0) target = $region83
            $region82: #{tpu_custom_call.1} parent=78 // pred_region
              loop: start=0, step=1, limit=1
              $region84: #{tpu_custom_call.1} parent=82 // loop_pre_header
                _
              $region85: #{tpu_custom_call.1} parent=82 // loop_header
                %s356 = sphi 0, %s360
                %p357 = scmp.ge.s32.totalorder %s356, 1
                %s361 = sphi %s350, %s350
                %s362 = sphi %s347, %s347
              $region86: #{tpu_custom_call.1} parent=82 // loop_header_branch
                %359 = sbr.rel (%p357) target = $region90
              $region87: #{tpu_custom_call.1} parent=82 // loop_body
                %v363 = vld [vmem:[%s361] sm:$0xff]
                %364 = vst [vmem:[%s362] sm:$0xff] %v363
                %v365 = vld [vmem:[%s361 + $0x8] sm:$0xff]
                %366 = vst [vmem:[%s362 + $0x8] sm:$0xff] %v365
                %v367 = vld [vmem:[%s361 + $0x20] sm:$0xff]
                %368 = vst [vmem:[%s362 + $0x10] sm:$0xff] %v367
                %v369 = vld [vmem:[%s361 + $0x28] sm:$0xff]
                %370 = vst [vmem:[%s362 + $0x18] sm:$0xff] %v369
                %v371 = vld [vmem:[%s361 + $0x40] sm:$0xff]
                %372 = vst [vmem:[%s362 + $0x20] sm:$0xff] %v371
                %v373 = vld [vmem:[%s361 + $0x48] sm:$0xff]
                %374 = vst [vmem:[%s362 + $0x28] sm:$0xff] %v373
                %v375 = vld [vmem:[%s361 + $0x60] sm:$0xff]
                %376 = vst [vmem:[%s362 + $0x30] sm:$0xff] %v375
                %v377 = vld [vmem:[%s361 + $0x68] sm:$0xff]
                %378 = vst [vmem:[%s362 + $0x38] sm:$0xff] %v377
                %v379 = vld [vmem:[%s361 + $0x80] sm:$0xff]
                %380 = vst [vmem:[%s362 + $0x40] sm:$0xff] %v379
                %v381 = vld [vmem:[%s361 + $0x88] sm:$0xff]
                %382 = vst [vmem:[%s362 + $0x48] sm:$0xff] %v381
                %v383 = vld [vmem:[%s361 + $0xa0] sm:$0xff]
                %384 = vst [vmem:[%s362 + $0x50] sm:$0xff] %v383
                %v385 = vld [vmem:[%s361 + $0xa8] sm:$0xff]
                %386 = vst [vmem:[%s362 + $0x58] sm:$0xff] %v385
                %v387 = vld [vmem:[%s361 + $0xc0] sm:$0xff]
                %388 = vst [vmem:[%s362 + $0x60] sm:$0xff] %v387
                %v389 = vld [vmem:[%s361 + $0xc8] sm:$0xff]
                %390 = vst [vmem:[%s362 + $0x68] sm:$0xff] %v389
                %v391 = vld [vmem:[%s361 + $0xe0] sm:$0xff]
                %392 = vst [vmem:[%s362 + $0x70] sm:$0xff] %v391
                %v393 = vld [vmem:[%s361 + $0xe8] sm:$0xff]
                %394 = vst [vmem:[%s362 + $0x78] sm:$0xff] %v393
                %v395 = vld [vmem:[%s361 + $0x100] sm:$0xff]
                %396 = vst [vmem:[%s362 + $0x80] sm:$0xff] %v395
                %v397 = vld [vmem:[%s361 + $0x108] sm:$0xff]
                %398 = vst [vmem:[%s362 + $0x88] sm:$0xff] %v397
                %v399 = vld [vmem:[%s361 + $0x120] sm:$0xff]
                %400 = vst [vmem:[%s362 + $0x90] sm:$0xff] %v399
                %v401 = vld [vmem:[%s361 + $0x128] sm:$0xff]
                %402 = vst [vmem:[%s362 + $0x98] sm:$0xff] %v401
                %v403 = vld [vmem:[%s361 + $0x140] sm:$0xff]
                %404 = vst [vmem:[%s362 + $0xa0] sm:$0xff] %v403
                %v405 = vld [vmem:[%s361 + $0x148] sm:$0xff]
                %406 = vst [vmem:[%s362 + $0xa8] sm:$0xff] %v405
                %v407 = vld [vmem:[%s361 + $0x160] sm:$0xff]
                %408 = vst [vmem:[%s362 + $0xb0] sm:$0xff] %v407
                %v409 = vld [vmem:[%s361 + $0x168] sm:$0xff]
                %410 = vst [vmem:[%s362 + $0xb8] sm:$0xff] %v409
                %v411 = vld [vmem:[%s361 + $0x180] sm:$0xff]
                %412 = vst [vmem:[%s362 + $0xc0] sm:$0xff] %v411
                %v413 = vld [vmem:[%s361 + $0x188] sm:$0xff]
                %414 = vst [vmem:[%s362 + $0xc8] sm:$0xff] %v413
                %v415 = vld [vmem:[%s361 + $0x1a0] sm:$0xff]
                %416 = vst [vmem:[%s362 + $0xd0] sm:$0xff] %v415
                %v417 = vld [vmem:[%s361 + $0x1a8] sm:$0xff]
                %418 = vst [vmem:[%s362 + $0xd8] sm:$0xff] %v417
                %v419 = vld [vmem:[%s361 + $0x1c0] sm:$0xff]
                %420 = vst [vmem:[%s362 + $0xe0] sm:$0xff] %v419
                %v421 = vld [vmem:[%s361 + $0x1c8] sm:$0xff]
                %422 = vst [vmem:[%s362 + $0xe8] sm:$0xff] %v421
                %v423 = vld [vmem:[%s361 + $0x1e0] sm:$0xff]
                %424 = vst [vmem:[%s362 + $0xf0] sm:$0xff] %v423
                %v425 = vld [vmem:[%s361 + $0x1e8] sm:$0xff]
                %426 = vst [vmem:[%s362 + $0xf8] sm:$0xff] %v425
                %v427 = vld [vmem:[%s361 + $0x200] sm:$0xff]
                %428 = vst [vmem:[%s362 + $0x100] sm:$0xff] %v427
                %v429 = vld [vmem:[%s361 + $0x208] sm:$0xff]
                %430 = vst [vmem:[%s362 + $0x108] sm:$0xff] %v429
                %v431 = vld [vmem:[%s361 + $0x220] sm:$0xff]
                %432 = vst [vmem:[%s362 + $0x110] sm:$0xff] %v431
                %v433 = vld [vmem:[%s361 + $0x228] sm:$0xff]
                %434 = vst [vmem:[%s362 + $0x118] sm:$0xff] %v433
                %v435 = vld [vmem:[%s361 + $0x240] sm:$0xff]
                %436 = vst [vmem:[%s362 + $0x120] sm:$0xff] %v435
                %v437 = vld [vmem:[%s361 + $0x248] sm:$0xff]
                %438 = vst [vmem:[%s362 + $0x128] sm:$0xff] %v437
                %v439 = vld [vmem:[%s361 + $0x260] sm:$0xff]
                %440 = vst [vmem:[%s362 + $0x130] sm:$0xff] %v439
                %v441 = vld [vmem:[%s361 + $0x268] sm:$0xff]
                %442 = vst [vmem:[%s362 + $0x138] sm:$0xff] %v441
                %v443 = vld [vmem:[%s361 + $0x280] sm:$0xff]
                %444 = vst [vmem:[%s362 + $0x140] sm:$0xff] %v443
                %v445 = vld [vmem:[%s361 + $0x288] sm:$0xff]
                %446 = vst [vmem:[%s362 + $0x148] sm:$0xff] %v445
                %v447 = vld [vmem:[%s361 + $0x2a0] sm:$0xff]
                %448 = vst [vmem:[%s362 + $0x150] sm:$0xff] %v447
                %v449 = vld [vmem:[%s361 + $0x2a8] sm:$0xff]
                %450 = vst [vmem:[%s362 + $0x158] sm:$0xff] %v449
                %v451 = vld [vmem:[%s361 + $0x2c0] sm:$0xff]
                %452 = vst [vmem:[%s362 + $0x160] sm:$0xff] %v451
                %v453 = vld [vmem:[%s361 + $0x2c8] sm:$0xff]
                %454 = vst [vmem:[%s362 + $0x168] sm:$0xff] %v453
                %v455 = vld [vmem:[%s361 + $0x2e0] sm:$0xff]
                %456 = vst [vmem:[%s362 + $0x170] sm:$0xff] %v455
                %v457 = vld [vmem:[%s361 + $0x2e8] sm:$0xff]
                %458 = vst [vmem:[%s362 + $0x178] sm:$0xff] %v457
                %v459 = vld [vmem:[%s361 + $0x300] sm:$0xff]
                %460 = vst [vmem:[%s362 + $0x180] sm:$0xff] %v459
                %v461 = vld [vmem:[%s361 + $0x308] sm:$0xff]
                %462 = vst [vmem:[%s362 + $0x188] sm:$0xff] %v461
                %v463 = vld [vmem:[%s361 + $0x320] sm:$0xff]
                %464 = vst [vmem:[%s362 + $0x190] sm:$0xff] %v463
                %v465 = vld [vmem:[%s361 + $0x328] sm:$0xff]
                %466 = vst [vmem:[%s362 + $0x198] sm:$0xff] %v465
                %v467 = vld [vmem:[%s361 + $0x340] sm:$0xff]
                %468 = vst [vmem:[%s362 + $0x1a0] sm:$0xff] %v467
                %v469 = vld [vmem:[%s361 + $0x348] sm:$0xff]
                %470 = vst [vmem:[%s362 + $0x1a8] sm:$0xff] %v469
                %v471 = vld [vmem:[%s361 + $0x360] sm:$0xff]
                %472 = vst [vmem:[%s362 + $0x1b0] sm:$0xff] %v471
                %v473 = vld [vmem:[%s361 + $0x368] sm:$0xff]
                %474 = vst [vmem:[%s362 + $0x1b8] sm:$0xff] %v473
                %v475 = vld [vmem:[%s361 + $0x380] sm:$0xff]
                %476 = vst [vmem:[%s362 + $0x1c0] sm:$0xff] %v475
                %v477 = vld [vmem:[%s361 + $0x388] sm:$0xff]
                %478 = vst [vmem:[%s362 + $0x1c8] sm:$0xff] %v477
                %v479 = vld [vmem:[%s361 + $0x3a0] sm:$0xff]
                %480 = vst [vmem:[%s362 + $0x1d0] sm:$0xff] %v479
                %v481 = vld [vmem:[%s361 + $0x3a8] sm:$0xff]
                %482 = vst [vmem:[%s362 + $0x1d8] sm:$0xff] %v481
                %v483 = vld [vmem:[%s361 + $0x3c0] sm:$0xff]
                %484 = vst [vmem:[%s362 + $0x1e0] sm:$0xff] %v483
                %v485 = vld [vmem:[%s361 + $0x3c8] sm:$0xff]
                %486 = vst [vmem:[%s362 + $0x1e8] sm:$0xff] %v485
                %v487 = vld [vmem:[%s361 + $0x3e0] sm:$0xff]
                %488 = vst [vmem:[%s362 + $0x1f0] sm:$0xff] %v487
                %v489 = vld [vmem:[%s361 + $0x3e8] sm:$0xff]
                %490 = vst [vmem:[%s362 + $0x1f8] sm:$0xff] %v489
                %v491 = vld [vmem:[%s361 + $0x400] sm:$0xff]
                %492 = vst [vmem:[%s362 + $0x200] sm:$0xff] %v491
                %v493 = vld [vmem:[%s361 + $0x408] sm:$0xff]
                %494 = vst [vmem:[%s362 + $0x208] sm:$0xff] %v493
                %v495 = vld [vmem:[%s361 + $0x420] sm:$0xff]
                %496 = vst [vmem:[%s362 + $0x210] sm:$0xff] %v495
                %v497 = vld [vmem:[%s361 + $0x428] sm:$0xff]
                %498 = vst [vmem:[%s362 + $0x218] sm:$0xff] %v497
                %v499 = vld [vmem:[%s361 + $0x440] sm:$0xff]
                %500 = vst [vmem:[%s362 + $0x220] sm:$0xff] %v499
                %v501 = vld [vmem:[%s361 + $0x448] sm:$0xff]
                %502 = vst [vmem:[%s362 + $0x228] sm:$0xff] %v501
                %v503 = vld [vmem:[%s361 + $0x460] sm:$0xff]
                %504 = vst [vmem:[%s362 + $0x230] sm:$0xff] %v503
                %v505 = vld [vmem:[%s361 + $0x468] sm:$0xff]
                %506 = vst [vmem:[%s362 + $0x238] sm:$0xff] %v505
                %v507 = vld [vmem:[%s361 + $0x480] sm:$0xff]
                %508 = vst [vmem:[%s362 + $0x240] sm:$0xff] %v507
                %v509 = vld [vmem:[%s361 + $0x488] sm:$0xff]
                %510 = vst [vmem:[%s362 + $0x248] sm:$0xff] %v509
                %v511 = vld [vmem:[%s361 + $0x4a0] sm:$0xff]
                %512 = vst [vmem:[%s362 + $0x250] sm:$0xff] %v511
                %v513 = vld [vmem:[%s361 + $0x4a8] sm:$0xff]
                %514 = vst [vmem:[%s362 + $0x258] sm:$0xff] %v513
                %v515 = vld [vmem:[%s361 + $0x4c0] sm:$0xff]
                %516 = vst [vmem:[%s362 + $0x260] sm:$0xff] %v515
                %v517 = vld [vmem:[%s361 + $0x4c8] sm:$0xff]
                %518 = vst [vmem:[%s362 + $0x268] sm:$0xff] %v517
                %v519 = vld [vmem:[%s361 + $0x4e0] sm:$0xff]
                %520 = vst [vmem:[%s362 + $0x270] sm:$0xff] %v519
                %v521 = vld [vmem:[%s361 + $0x4e8] sm:$0xff]
                %522 = vst [vmem:[%s362 + $0x278] sm:$0xff] %v521
                %v523 = vld [vmem:[%s361 + $0x500] sm:$0xff]
                %524 = vst [vmem:[%s362 + $0x280] sm:$0xff] %v523
                %v525 = vld [vmem:[%s361 + $0x508] sm:$0xff]
                %526 = vst [vmem:[%s362 + $0x288] sm:$0xff] %v525
                %v527 = vld [vmem:[%s361 + $0x520] sm:$0xff]
                %528 = vst [vmem:[%s362 + $0x290] sm:$0xff] %v527
                %v529 = vld [vmem:[%s361 + $0x528] sm:$0xff]
                %530 = vst [vmem:[%s362 + $0x298] sm:$0xff] %v529
                %v531 = vld [vmem:[%s361 + $0x540] sm:$0xff]
                %532 = vst [vmem:[%s362 + $0x2a0] sm:$0xff] %v531
                %v533 = vld [vmem:[%s361 + $0x548] sm:$0xff]
                %534 = vst [vmem:[%s362 + $0x2a8] sm:$0xff] %v533
                %v535 = vld [vmem:[%s361 + $0x560] sm:$0xff]
                %536 = vst [vmem:[%s362 + $0x2b0] sm:$0xff] %v535
                %v537 = vld [vmem:[%s361 + $0x568] sm:$0xff]
                %538 = vst [vmem:[%s362 + $0x2b8] sm:$0xff] %v537
                %v539 = vld [vmem:[%s361 + $0x580] sm:$0xff]
                %540 = vst [vmem:[%s362 + $0x2c0] sm:$0xff] %v539
                %v541 = vld [vmem:[%s361 + $0x588] sm:$0xff]
                %542 = vst [vmem:[%s362 + $0x2c8] sm:$0xff] %v541
                %v543 = vld [vmem:[%s361 + $0x5a0] sm:$0xff]
                %544 = vst [vmem:[%s362 + $0x2d0] sm:$0xff] %v543
                %v545 = vld [vmem:[%s361 + $0x5a8] sm:$0xff]
                %546 = vst [vmem:[%s362 + $0x2d8] sm:$0xff] %v545
                %v547 = vld [vmem:[%s361 + $0x5c0] sm:$0xff]
                %548 = vst [vmem:[%s362 + $0x2e0] sm:$0xff] %v547
                %v549 = vld [vmem:[%s361 + $0x5c8] sm:$0xff]
                %550 = vst [vmem:[%s362 + $0x2e8] sm:$0xff] %v549
                %v551 = vld [vmem:[%s361 + $0x5e0] sm:$0xff]
                %552 = vst [vmem:[%s362 + $0x2f0] sm:$0xff] %v551
                %v553 = vld [vmem:[%s361 + $0x5e8] sm:$0xff]
                %554 = vst [vmem:[%s362 + $0x2f8] sm:$0xff] %v553
                %v555 = vld [vmem:[%s361 + $0x600] sm:$0xff]
                %556 = vst [vmem:[%s362 + $0x300] sm:$0xff] %v555
                %v557 = vld [vmem:[%s361 + $0x608] sm:$0xff]
                %558 = vst [vmem:[%s362 + $0x308] sm:$0xff] %v557
                %v559 = vld [vmem:[%s361 + $0x620] sm:$0xff]
                %560 = vst [vmem:[%s362 + $0x310] sm:$0xff] %v559
                %v561 = vld [vmem:[%s361 + $0x628] sm:$0xff]
                %562 = vst [vmem:[%s362 + $0x318] sm:$0xff] %v561
                %v563 = vld [vmem:[%s361 + $0x640] sm:$0xff]
                %564 = vst [vmem:[%s362 + $0x320] sm:$0xff] %v563
                %v565 = vld [vmem:[%s361 + $0x648] sm:$0xff]
                %566 = vst [vmem:[%s362 + $0x328] sm:$0xff] %v565
                %v567 = vld [vmem:[%s361 + $0x660] sm:$0xff]
                %568 = vst [vmem:[%s362 + $0x330] sm:$0xff] %v567
                %v569 = vld [vmem:[%s361 + $0x668] sm:$0xff]
                %570 = vst [vmem:[%s362 + $0x338] sm:$0xff] %v569
                %v571 = vld [vmem:[%s361 + $0x680] sm:$0xff]
                %572 = vst [vmem:[%s362 + $0x340] sm:$0xff] %v571
                %v573 = vld [vmem:[%s361 + $0x688] sm:$0xff]
                %574 = vst [vmem:[%s362 + $0x348] sm:$0xff] %v573
                %v575 = vld [vmem:[%s361 + $0x6a0] sm:$0xff]
                %576 = vst [vmem:[%s362 + $0x350] sm:$0xff] %v575
                %v577 = vld [vmem:[%s361 + $0x6a8] sm:$0xff]
                %578 = vst [vmem:[%s362 + $0x358] sm:$0xff] %v577
                %v579 = vld [vmem:[%s361 + $0x6c0] sm:$0xff]
                %580 = vst [vmem:[%s362 + $0x360] sm:$0xff] %v579
                %v581 = vld [vmem:[%s361 + $0x6c8] sm:$0xff]
                %582 = vst [vmem:[%s362 + $0x368] sm:$0xff] %v581
                %v583 = vld [vmem:[%s361 + $0x6e0] sm:$0xff]
                %584 = vst [vmem:[%s362 + $0x370] sm:$0xff] %v583
                %v585 = vld [vmem:[%s361 + $0x6e8] sm:$0xff]
                %586 = vst [vmem:[%s362 + $0x378] sm:$0xff] %v585
                %v587 = vld [vmem:[%s361 + $0x700] sm:$0xff]
                %588 = vst [vmem:[%s362 + $0x380] sm:$0xff] %v587
                %v589 = vld [vmem:[%s361 + $0x708] sm:$0xff]
                %590 = vst [vmem:[%s362 + $0x388] sm:$0xff] %v589
                %v591 = vld [vmem:[%s361 + $0x720] sm:$0xff]
                %592 = vst [vmem:[%s362 + $0x390] sm:$0xff] %v591
                %v593 = vld [vmem:[%s361 + $0x728] sm:$0xff]
                %594 = vst [vmem:[%s362 + $0x398] sm:$0xff] %v593
                %v595 = vld [vmem:[%s361 + $0x740] sm:$0xff]
                %596 = vst [vmem:[%s362 + $0x3a0] sm:$0xff] %v595
                %v597 = vld [vmem:[%s361 + $0x748] sm:$0xff]
                %598 = vst [vmem:[%s362 + $0x3a8] sm:$0xff] %v597
                %v599 = vld [vmem:[%s361 + $0x760] sm:$0xff]
                %600 = vst [vmem:[%s362 + $0x3b0] sm:$0xff] %v599
                %v601 = vld [vmem:[%s361 + $0x768] sm:$0xff]
                %602 = vst [vmem:[%s362 + $0x3b8] sm:$0xff] %v601
                %v603 = vld [vmem:[%s361 + $0x780] sm:$0xff]
                %604 = vst [vmem:[%s362 + $0x3c0] sm:$0xff] %v603
                %v605 = vld [vmem:[%s361 + $0x788] sm:$0xff]
                %606 = vst [vmem:[%s362 + $0x3c8] sm:$0xff] %v605
                %v607 = vld [vmem:[%s361 + $0x7a0] sm:$0xff]
                %608 = vst [vmem:[%s362 + $0x3d0] sm:$0xff] %v607
                %v609 = vld [vmem:[%s361 + $0x7a8] sm:$0xff]
                %610 = vst [vmem:[%s362 + $0x3d8] sm:$0xff] %v609
                %v611 = vld [vmem:[%s361 + $0x7c0] sm:$0xff]
                %612 = vst [vmem:[%s362 + $0x3e0] sm:$0xff] %v611
                %v613 = vld [vmem:[%s361 + $0x7c8] sm:$0xff]
                %614 = vst [vmem:[%s362 + $0x3e8] sm:$0xff] %v613
                %v615 = vld [vmem:[%s361 + $0x7e0] sm:$0xff]
                %616 = vst [vmem:[%s362 + $0x3f0] sm:$0xff] %v615
                %v617 = vld [vmem:[%s361 + $0x7e8] sm:$0xff]
                %618 = vst [vmem:[%s362 + $0x3f8] sm:$0xff] %v617
              $region88: #{tpu_custom_call.1} parent=82 // loop_footer
                %s360 = sadd.s32 1, %s356
              $region89: #{tpu_custom_call.1} parent=82 // loop_footer_branch
                %355 = sbr.rel target = $region85
              $region90: #{tpu_custom_call.1} parent=82 // loop_exit
                _
            $region83: #{tpu_custom_call.1} parent=78 // pred_fallthru
              _
            // Predicated region
            $region91: #{tpu_custom_call.1} parent=78 // pred_check
              _
            $region92: #{tpu_custom_call.1} parent=78 // pred_check_branch
              %620 = sbr.rel target = $region94
            $region93: #{tpu_custom_call.1} parent=78 // pred_region
              _
            $region94: #{tpu_custom_call.1} parent=78 // pred_fallthru
              _
          $region79: #{tpu_custom_call.1} parent=74 // pred_fallthru
            _
          %621 = vnop
        $region75: #{tpu_custom_call.1} parent=47 // pred_fallthru
          _
      $region48: #{tpu_custom_call.1} parent=5 // pred_fallthru
        _
      %p622 = scmp.le.s32.totalorder 1, %s19
      %p623 = scmp.lt.s32.totalorder %s19, 3
      %p624 = pnand %p622, %p623
      %p625 = pneg %p624
      // Predicated region
      $region95: #{tpu_custom_call.1} parent=5 // pred_check
        _
      $region96: #{tpu_custom_call.1} parent=5 // pred_check_branch
        %627 = sbr.rel (%p624) target = $region98
      $region97: #{tpu_custom_call.1} parent=5 // pred_region
        %s628 = ssub.s32 %s19, 1
        %s629 = sand.u32 %s32, 1
        %s630 = sand.u32 %s32, 1
        %s631 = smul.addr %s630, 32
        %s632 = scalar_lea.vmem [#allocation2], %s631
        // Predicated region
        $region99: #{tpu_custom_call.1} parent=97 // pred_check
          %p633 = pneg %p45
        $region100: #{tpu_custom_call.1} parent=97 // pred_check_branch
          %635 = sbr.rel (%p633) target = $region102
        $region101: #{tpu_custom_call.1} parent=97 // pred_region
          _
        $region102: #{tpu_custom_call.1} parent=97 // pred_fallthru
          _
        %s636 = sand.u32 %s58, 1
        %s637 = sand.u32 %s58, 1
        %s638 = smul.addr %s637, 1024
        %s639 = scalar_lea.vmem [#allocation3], %s638
        // Predicated region
        $region103: #{tpu_custom_call.1} parent=97 // pred_check
          %p640 = pneg %p71
        $region104: #{tpu_custom_call.1} parent=97 // pred_check_branch
          %642 = sbr.rel (%p640) target = $region106
        $region105: #{tpu_custom_call.1} parent=97 // pred_region
          _
        $region106: #{tpu_custom_call.1} parent=97 // pred_fallthru
          _
        %s643 = sand.u32 %s32, 1
        %s644 = sand.u32 %s32, 1
        %s645 = smul.addr %s644, 32
        %s646 = scalar_lea.vmem [#allocation2], %s645
        %p647 = pneg %p45
        %p648 = pneg %p42
        %s649 = sand.u32 %s58, 1
        %s650 = sand.u32 %s58, 1
        %s651 = smul.addr %s650, 1024
        %s652 = scalar_lea.vmem [#allocation3], %s651
        %p653 = pneg %p71
        %p654 = pneg %p68
        %p655 = pneg %p92
        %p656 = pneg %p89
        %p657 = pneg %p113
        %p658 = pneg %p110
        %p659 = pneg %p134
        %p660 = pneg %p131
        %p661 = pneg %p155
        %p662 = pneg %p152
        %p663 = pneg %p176
        %p664 = pneg %p173
        %p665 = pneg %p197
        %p666 = pneg %p194
        %p667 = pneg %p218
        %p668 = pneg %p215
        %p669 = pneg %p239
        %p670 = pneg %p236
        %p671 = pneg %p265
        %p672 = pneg %p262
        %s673 = sand.u32 %s252, 1
        %s674 = scalar_lea.sflag [#allocation5], %s673
        %s675 = sand.u32 %s252, 1
        %s676 = smul.addr %s675, 32
        %s677 = scalar_lea.vmem [#allocation4], %s676
        %s678 = smul.u32 2, %s24
        %s679 = smul.u32 2, %s24
        %s680 = smul.u32 2, %s24
        %v681 = vld [vmem:[%s632] sm:$0xff]
        %v682 = vld [vmem:[%s632 + $0x8] sm:$0xff]
        %v683 = vld [vmem:[%s632 + $0x10] sm:$0xff]
        %v684 = vld [vmem:[%s632 + $0x18] sm:$0xff]
        %v685 = vld [vmem:[%s639] sm:$0xff]
        %v686 = vld [vmem:[%s639 + $0x8] sm:$0xff]
        %v687 = vld [vmem:[%s639 + $0x10] sm:$0xff]
        %v688 = vld [vmem:[%s639 + $0x18] sm:$0xff]
        %v689 = vld [vmem:[%s639 + $0x20] sm:$0xff]
        %v690 = vld [vmem:[%s639 + $0x28] sm:$0xff]
        %v691 = vld [vmem:[%s639 + $0x30] sm:$0x1]
        %v692 = vld [vmem:[%s639 + $0x38] sm:$0x1]
        %v693 = vld [vmem:[%s639 + $0x40] sm:$0xff]
        %v694 = vld [vmem:[%s639 + $0x48] sm:$0xff]
        %v695 = vld [vmem:[%s639 + $0x50] sm:$0xff]
        %v696 = vld [vmem:[%s639 + $0x58] sm:$0xff]
        %v697 = vld [vmem:[%s639 + $0x60] sm:$0xff]
        %v698 = vld [vmem:[%s639 + $0x68] sm:$0xff]
        %v699 = vld [vmem:[%s639 + $0x70] sm:$0x1]
        %v700 = vld [vmem:[%s639 + $0x78] sm:$0x1]
        %v701 = vld [vmem:[%s639 + $0x80] sm:$0xff]
        %v702 = vld [vmem:[%s639 + $0x88] sm:$0xff]
        %v703 = vld [vmem:[%s639 + $0x90] sm:$0xff]
        %v704 = vld [vmem:[%s639 + $0x98] sm:$0xff]
        %v705 = vld [vmem:[%s639 + $0xa0] sm:$0xff]
        %v706 = vld [vmem:[%s639 + $0xa8] sm:$0xff]
        %v707 = vld [vmem:[%s639 + $0xb0] sm:$0x1]
        %v708 = vld [vmem:[%s639 + $0xb8] sm:$0x1]
        %v709 = vld [vmem:[%s639 + $0xc0] sm:$0xff]
        %v710 = vld [vmem:[%s639 + $0xc8] sm:$0xff]
        %v711 = vld [vmem:[%s639 + $0xd0] sm:$0xff]
        %v712 = vld [vmem:[%s639 + $0xd8] sm:$0xff]
        %v713 = vld [vmem:[%s639 + $0xe0] sm:$0xff]
        %v714 = vld [vmem:[%s639 + $0xe8] sm:$0xff]
        %v715 = vld [vmem:[%s639 + $0xf0] sm:$0x1]
        %v716 = vld [vmem:[%s639 + $0xf8] sm:$0x1]
        %v717 = vld [vmem:[%s639 + $0x100] sm:$0xff]
        %v718 = vld [vmem:[%s639 + $0x108] sm:$0xff]
        %v719 = vld [vmem:[%s639 + $0x110] sm:$0xff]
        %v720 = vld [vmem:[%s639 + $0x118] sm:$0xff]
        %v721 = vld [vmem:[%s639 + $0x120] sm:$0xff]
        %v722 = vld [vmem:[%s639 + $0x128] sm:$0xff]
        %v723 = vld [vmem:[%s639 + $0x130] sm:$0x1]
        %v724 = vld [vmem:[%s639 + $0x138] sm:$0x1]
        %v725 = vld [vmem:[%s639 + $0x140] sm:$0xff]
        %v726 = vld [vmem:[%s639 + $0x148] sm:$0xff]
        %v727 = vld [vmem:[%s639 + $0x150] sm:$0xff]
        %v728 = vld [vmem:[%s639 + $0x158] sm:$0xff]
        %v729 = vld [vmem:[%s639 + $0x160] sm:$0xff]
        %v730 = vld [vmem:[%s639 + $0x168] sm:$0xff]
        %v731 = vld [vmem:[%s639 + $0x170] sm:$0x1]
        %v732 = vld [vmem:[%s639 + $0x178] sm:$0x1]
        %v733 = vld [vmem:[%s639 + $0x180] sm:$0xff]
        %v734 = vld [vmem:[%s639 + $0x188] sm:$0xff]
        %v735 = vld [vmem:[%s639 + $0x190] sm:$0xff]
        %v736 = vld [vmem:[%s639 + $0x198] sm:$0xff]
        %v737 = vld [vmem:[%s639 + $0x1a0] sm:$0xff]
        %v738 = vld [vmem:[%s639 + $0x1a8] sm:$0xff]
        %v739 = vld [vmem:[%s639 + $0x1b0] sm:$0x1]
        %v740 = vld [vmem:[%s639 + $0x1b8] sm:$0x1]
        %v741 = vld [vmem:[%s639 + $0x1c0] sm:$0xff]
        %v742 = vld [vmem:[%s639 + $0x1c8] sm:$0xff]
        %v743 = vld [vmem:[%s639 + $0x1d0] sm:$0xff]
        %v744 = vld [vmem:[%s639 + $0x1d8] sm:$0xff]
        %v745 = vld [vmem:[%s639 + $0x1e0] sm:$0xff]
        %v746 = vld [vmem:[%s639 + $0x1e8] sm:$0xff]
        %v747 = vld [vmem:[%s639 + $0x1f0] sm:$0x1]
        %v748 = vld [vmem:[%s639 + $0x1f8] sm:$0x1]
        %v749 = vld [vmem:[%s639 + $0x200] sm:$0xff]
        %v750 = vld [vmem:[%s639 + $0x208] sm:$0xff]
        %v751 = vld [vmem:[%s639 + $0x210] sm:$0xff]
        %v752 = vld [vmem:[%s639 + $0x218] sm:$0xff]
        %v753 = vld [vmem:[%s639 + $0x220] sm:$0xff]
        %v754 = vld [vmem:[%s639 + $0x228] sm:$0xff]
        %v755 = vld [vmem:[%s639 + $0x230] sm:$0x1]
        %v756 = vld [vmem:[%s639 + $0x238] sm:$0x1]
        %v757 = vld [vmem:[%s639 + $0x240] sm:$0xff]
        %v758 = vld [vmem:[%s639 + $0x248] sm:$0xff]
        %v759 = vld [vmem:[%s639 + $0x250] sm:$0xff]
        %v760 = vld [vmem:[%s639 + $0x258] sm:$0xff]
        %v761 = vld [vmem:[%s639 + $0x260] sm:$0xff]
        %v762 = vld [vmem:[%s639 + $0x268] sm:$0xff]
        %v763 = vld [vmem:[%s639 + $0x270] sm:$0x1]
        %v764 = vld [vmem:[%s639 + $0x278] sm:$0x1]
        %v765 = vld [vmem:[%s639 + $0x280] sm:$0xff]
        %v766 = vld [vmem:[%s639 + $0x288] sm:$0xff]
        %v767 = vld [vmem:[%s639 + $0x290] sm:$0xff]
        %v768 = vld [vmem:[%s639 + $0x298] sm:$0xff]
        %v769 = vld [vmem:[%s639 + $0x2a0] sm:$0xff]
        %v770 = vld [vmem:[%s639 + $0x2a8] sm:$0xff]
        %v771 = vld [vmem:[%s639 + $0x2b0] sm:$0x1]
        %v772 = vld [vmem:[%s639 + $0x2b8] sm:$0x1]
        %v773 = vld [vmem:[%s639 + $0x2c0] sm:$0xff]
        %v774 = vld [vmem:[%s639 + $0x2c8] sm:$0xff]
        %v775 = vld [vmem:[%s639 + $0x2d0] sm:$0xff]
        %v776 = vld [vmem:[%s639 + $0x2d8] sm:$0xff]
        %v777 = vld [vmem:[%s639 + $0x2e0] sm:$0xff]
        %v778 = vld [vmem:[%s639 + $0x2e8] sm:$0xff]
        %v779 = vld [vmem:[%s639 + $0x2f0] sm:$0x1]
        %v780 = vld [vmem:[%s639 + $0x2f8] sm:$0x1]
        %v781 = vld [vmem:[%s639 + $0x300] sm:$0xff]
        %v782 = vld [vmem:[%s639 + $0x308] sm:$0xff]
        %v783 = vld [vmem:[%s639 + $0x310] sm:$0xff]
        %v784 = vld [vmem:[%s639 + $0x318] sm:$0xff]
        %v785 = vld [vmem:[%s639 + $0x320] sm:$0xff]
        %v786 = vld [vmem:[%s639 + $0x328] sm:$0xff]
        %v787 = vld [vmem:[%s639 + $0x330] sm:$0x1]
        %v788 = vld [vmem:[%s639 + $0x338] sm:$0x1]
        %v789 = vld [vmem:[%s639 + $0x340] sm:$0xff]
        %v790 = vld [vmem:[%s639 + $0x348] sm:$0xff]
        %v791 = vld [vmem:[%s639 + $0x350] sm:$0xff]
        %v792 = vld [vmem:[%s639 + $0x358] sm:$0xff]
        %v793 = vld [vmem:[%s639 + $0x360] sm:$0xff]
        %v794 = vld [vmem:[%s639 + $0x368] sm:$0xff]
        %v795 = vld [vmem:[%s639 + $0x370] sm:$0x1]
        %v796 = vld [vmem:[%s639 + $0x378] sm:$0x1]
        %v797 = vld [vmem:[%s639 + $0x380] sm:$0xff]
        %v798 = vld [vmem:[%s639 + $0x388] sm:$0xff]
        %v799 = vld [vmem:[%s639 + $0x390] sm:$0xff]
        %v800 = vld [vmem:[%s639 + $0x398] sm:$0xff]
        %v801 = vld [vmem:[%s639 + $0x3a0] sm:$0xff]
        %v802 = vld [vmem:[%s639 + $0x3a8] sm:$0xff]
        %v803 = vld [vmem:[%s639 + $0x3b0] sm:$0x1]
        %v804 = vld [vmem:[%s639 + $0x3b8] sm:$0x1]
        %v805 = vld [vmem:[%s639 + $0x3c0] sm:$0xff]
        %v806 = vld [vmem:[%s639 + $0x3c8] sm:$0xff]
        %v807 = vld [vmem:[%s639 + $0x3d0] sm:$0xff]
        %v808 = vld [vmem:[%s639 + $0x3d8] sm:$0xff]
        %v809 = vld [vmem:[%s639 + $0x3e0] sm:$0xff]
        %v810 = vld [vmem:[%s639 + $0x3e8] sm:$0xff]
        %v811 = vld [vmem:[%s639 + $0x3f0] sm:$0x1]
        %v812 = vld [vmem:[%s639 + $0x3f8] sm:$0x1]
        %v813 = vld [vmem:[%s2] sm:$0xff]
        %v814 = vld [vmem:[%s2 + $0x8] sm:$0xff]
        %v815 = vld [vmem:[%s2 + $0x10] sm:$0xff]
        %v816 = vld [vmem:[%s2 + $0x18] sm:$0xff]
        %v817 = vld [vmem:[%s3] sm:$0xff]
        %v818 = vld [vmem:[%s3 + $0x8] sm:$0xff]
        %v819 = vld [vmem:[%s3 + $0x10] sm:$0xff]
        %v820 = vld [vmem:[%s3 + $0x18] sm:$0xff]
        %822 = vset.pattern.permute.xlu0 0
        %823 = vperm.xlu0 %822, %v817
        %v824 = vpop.permute.xlu0 %823
        %827 = vset.pattern.permute.xlu0 0
        %828 = vperm.xlu0 %827, %v818
        %v829 = vpop.permute.xlu0 %828
        %832 = vset.pattern.permute.xlu0 0
        %833 = vperm.xlu0 %832, %v819
        %v834 = vpop.permute.xlu0 %833
        %837 = vset.pattern.permute.xlu0 0
        %838 = vperm.xlu0 %837, %v820
        %v839 = vpop.permute.xlu0 %838
        %vm841 = vcmask 130048
        %v843 = vsel %vm841, %v813, 0
        %v846 = vsel %vm841, %v814, 0
        %v849 = vsel %vm841, %v815, 0
        %v852 = vsel %vm841, %v816, 0
        %854 = vmatprep.subr.mxu0 0.0
        %855 = vmatpush1.msra.mxu0 0.0
        %856 = vmatprep.subr.mxu0 0.0
        %857 = vmatpush1.msra.mxu0 0.0
        %858 = vmatprep.subr.mxu0 0.0
        %859 = vmatpush1.msra.mxu0 0.0
        %860 = vmatprep.subr.mxu0 0.0
        %861 = vmatpush1.msra.mxu0 0.0
        %862 = vmatprep.subr.mxu0 0.0
        %863 = vmatpush1.msra.mxu0 0.0
        %864 = vmatprep.subr.mxu0 0.0
        %865 = vmatpush1.msra.mxu0 0.0
        %866 = vmatprep.subr.mxu0 0.0
        %867 = vmatpush1.msra.mxu0 0.0
        %868 = vmatprep.subr.mxu0 0.0
        %869 = vmatpush1.msra.mxu0 0.0
        %870 = vmatprep.subr.mxu0 0.0
        %871 = vmatpush1.msra.mxu0 0.0
        %872 = vmatprep.subr.mxu0 0.0
        %873 = vmatpush1.msra.mxu0 0.0
        %874 = vmatprep.subr.mxu0 0.0
        %875 = vmatpush1.msra.mxu0 0.0
        %876 = vmatprep.subr.mxu0 0.0
        %877 = vmatpush1.msra.mxu0 0.0
        %878 = vmatprep.subr.mxu0 0.0
        %879 = vmatpush1.msra.mxu0 0.0
        %880 = vmatprep.subr.mxu0 0.0
        %881 = vmatpush1.msra.mxu0 0.0
        %882 = vmatprep.subr.mxu0 %v684
        %883 = vmatpush1.msra.mxu0 %v683
        %884 = vmatprep.subr.mxu0 %v682
        %885 = vmatpush1.msra.mxu0 %v681
        %886 = vmatprep.subr.mxu0 0.0
        %887 = vmatpush2.msra.mxu0 0.0
        %888 = vmatprep.subr.mxu0 0.0
        %889 = vmatpush2.msra.mxu0 0.0
        %890 = vmatprep.subr.mxu0 0.0
        %891 = vmatpush2.msra.mxu0 0.0
        %892 = vmatprep.subr.mxu0 0.0
        %893 = vmatpush2.msra.mxu0 0.0
        %894 = vmatprep.subr.mxu0 0.0
        %895 = vmatpush2.msra.mxu0 0.0
        %896 = vmatprep.subr.mxu0 0.0
        %897 = vmatpush2.msra.mxu0 0.0
        %898 = vmatprep.subr.mxu0 0.0
        %899 = vmatpush2.msra.mxu0 0.0
        %900 = vmatprep.subr.mxu0 0.0
        %901 = vmatpush2.msra.mxu0 0.0
        %902 = vmatprep.subr.mxu0 0.0
        %903 = vmatpush2.msra.mxu0 0.0
        %904 = vmatprep.subr.mxu0 0.0
        %905 = vmatpush2.msra.mxu0 0.0
        %906 = vmatprep.subr.mxu0 0.0
        %907 = vmatpush2.msra.mxu0 0.0
        %908 = vmatprep.subr.mxu0 0.0
        %909 = vmatpush2.msra.mxu0 0.0
        %910 = vmatprep.subr.mxu0 0.0
        %911 = vmatpush2.msra.mxu0 0.0
        %912 = vmatprep.subr.mxu0 0.0
        %913 = vmatpush2.msra.mxu0 0.0
        %914 = vmatprep.subr.mxu0 0.0
        %915 = vmatpush2.msra.mxu0 0.0
        %916 = vmatprep.subr.mxu0 0.0
        %917 = vmatpush2.msra.mxu0 0.0
        %918 = vmatprep.mubr.f32.mxu0 0.0
        %919 = vmatmul.mubr.f32.gmra.mxu0 %v843
        %v920 = vpop.f32.mrf.mxu0
        %v921 = vadd.f32 %v824, %v920
        %v922 = vpop.f32.mrf.mxu0
        %v923 = vadd.f32 %v824, %v922
        %924 = vmatprep.mubr.f32.mxu0 0.0
        %925 = vmatmul.mubr.f32.gmra.mxu0 %v846
        %v926 = vpop.f32.mrf.mxu0
        %v927 = vadd.f32 %v829, %v926
        %v928 = vpop.f32.mrf.mxu0
        %v929 = vadd.f32 %v829, %v928
        %930 = vmatprep.mubr.f32.mxu0 0.0
        %931 = vmatmul.mubr.f32.gmra.mxu0 %v849
        %v932 = vpop.f32.mrf.mxu0
        %v933 = vadd.f32 %v834, %v932
        %v934 = vpop.f32.mrf.mxu0
        %v935 = vadd.f32 %v834, %v934
        %936 = vmatprep.mubr.f32.mxu0 0.0
        %937 = vmatmul.mubr.f32.gmra.mxu0 %v852
        %v938 = vpop.f32.mrf.mxu0
        %v939 = vadd.f32 %v839, %v938
        %v940 = vpop.f32.mrf.mxu0
        %v941 = vadd.f32 %v839, %v940
        %942 = vdwg.mxu0
        %v943 = vld [vmem:[%s4] sm:$0xff]
        %v944 = vld [vmem:[%s4 + $0x8] sm:$0xff]
        %vm945 = vcmask 261120
        %v947 = vsel %vm945, %v943, 0
        %v950 = vsel %vm945, %v944, 0
        %952 = vmatprep.subr.mxu0 0.0
        %953 = vmatpush1.msra.mxu0 0.0
        %954 = vmatprep.subr.mxu0 0.0
        %955 = vmatpush1.msra.mxu0 0.0
        %956 = vmatprep.subr.mxu0 0.0
        %957 = vmatpush1.msra.mxu0 0.0
        %958 = vmatprep.subr.mxu0 0.0
        %959 = vmatpush1.msra.mxu0 0.0
        %960 = vmatprep.subr.mxu0 0.0
        %961 = vmatpush1.msra.mxu0 0.0
        %962 = vmatprep.subr.mxu0 0.0
        %963 = vmatpush1.msra.mxu0 0.0
        %964 = vmatprep.subr.mxu0 0.0
        %965 = vmatpush1.msra.mxu0 0.0
        %966 = vmatprep.subr.mxu0 0.0
        %967 = vmatpush1.msra.mxu0 0.0
        %968 = vmatprep.subr.mxu0 0.0
        %969 = vmatpush1.msra.mxu0 0.0
        %970 = vmatprep.subr.mxu0 0.0
        %971 = vmatpush1.msra.mxu0 0.0
        %972 = vmatprep.subr.mxu0 0.0
        %973 = vmatpush1.msra.mxu0 0.0
        %974 = vmatprep.subr.mxu0 0.0
        %975 = vmatpush1.msra.mxu0 0.0
        %976 = vmatprep.subr.mxu0 %v941
        %977 = vmatpush1.msra.mxu0 %v939
        %978 = vmatprep.subr.mxu0 %v935
        %979 = vmatpush1.msra.mxu0 %v933
        %980 = vmatprep.subr.mxu0 %v929
        %981 = vmatpush1.msra.mxu0 %v927
        %982 = vmatprep.subr.mxu0 %v923
        %983 = vmatpush1.msra.mxu0 %v921
        %984 = vmatprep.subr.mxu0 0.0
        %985 = vmatpush2.msra.mxu0 0.0
        %986 = vmatprep.subr.mxu0 0.0
        %987 = vmatpush2.msra.mxu0 0.0
        %988 = vmatprep.subr.mxu0 0.0
        %989 = vmatpush2.msra.mxu0 0.0
        %990 = vmatprep.subr.mxu0 0.0
        %991 = vmatpush2.msra.mxu0 0.0
        %992 = vmatprep.subr.mxu0 0.0
        %993 = vmatpush2.msra.mxu0 0.0
        %994 = vmatprep.subr.mxu0 0.0
        %995 = vmatpush2.msra.mxu0 0.0
        %996 = vmatprep.subr.mxu0 0.0
        %997 = vmatpush2.msra.mxu0 0.0
        %998 = vmatprep.subr.mxu0 0.0
        %999 = vmatpush2.msra.mxu0 0.0
        %1000 = vmatprep.subr.mxu0 0.0
        %1001 = vmatpush2.msra.mxu0 0.0
        %1002 = vmatprep.subr.mxu0 0.0
        %1003 = vmatpush2.msra.mxu0 0.0
        %1004 = vmatprep.subr.mxu0 0.0
        %1005 = vmatpush2.msra.mxu0 0.0
        %1006 = vmatprep.subr.mxu0 0.0
        %1007 = vmatpush2.msra.mxu0 0.0
        %1008 = vmatprep.subr.mxu0 0.0
        %1009 = vmatpush2.msra.mxu0 0.0
        %1010 = vmatprep.subr.mxu0 0.0
        %1011 = vmatpush2.msra.mxu0 0.0
        %1012 = vmatprep.subr.mxu0 0.0
        %1013 = vmatpush2.msra.mxu0 0.0
        %1014 = vmatprep.subr.mxu0 0.0
        %1015 = vmatpush2.msra.mxu0 0.0
        %1016 = vmatprep.mubr.f32.mxu0 0.0
        %1017 = vmatmul.mubr.f32.gmra.mxu0 %v947
        %v1018 = vpop.f32.mrf.mxu0
        %v1019 = vadd.f32 0.0, %v1018
        %v1020 = vpop.f32.mrf.mxu0
        %v1021 = vadd.f32 0.0, %v1020
        %1022 = vmatprep.mubr.f32.mxu0 0.0
        %1023 = vmatmul.mubr.f32.gmra.mxu0 %v950
        %v1024 = vpop.f32.mrf.mxu0
        %v1025 = vadd.f32 0.0, %v1024
        %v1026 = vpop.f32.mrf.mxu0
        %v1027 = vadd.f32 0.0, %v1026
        %1028 = vdwg.mxu0
        %v1033 = vcombine.low %v1019, %v1021
        %v1034 = vcombine.high %v1019, %v1021
        %v1036 = vunpack.c.l.s4 1966171168
        %v1037 = vunpack.c.0.s8 %v1036
        %v1038 = vlaneseq
        %v1039 = vshrl.u32 %v1038, 7
        %v1040 = vsub.s32 %v1037, %v1039
        %v1041 = vrot.slane %v1033, %v1040
        %v1043 = vunpack.c.l.s4 1966171168
        %v1044 = vunpack.c.0.s8 %v1043
        %v1045 = vlaneseq
        %v1046 = vshrl.u32 %v1045, 7
        %v1047 = vsub.s32 %v1044, %v1046
        %v1048 = vrot.slane %v1034, %v1047
        %v1049 = vcombine.high %v1041, %v1041
        %v1050 = vcombine.high %v1048, %v1048
        %v1052 = vunpack.c.l.s4 1966171168
        %v1053 = vunpack.c.0.s8 %v1052
        %v1054 = vlaneseq
        %v1055 = vshrl.u32 %v1054, 7
        %v1056 = vsub.s32 %v1053, %v1055
        %v1057 = vrot.slane %v1041, %v1056
        %v1059 = vunpack.c.l.s4 1966171168
        %v1060 = vunpack.c.0.s8 %v1059
        %v1061 = vlaneseq
        %v1062 = vshrl.u32 %v1061, 7
        %v1063 = vsub.s32 %v1060, %v1062
        %v1064 = vrot.slane %v1048, %v1063
        %v1066 = vunpack.c.l.s4 1966171168
        %v1067 = vunpack.c.0.s8 %v1066
        %v1068 = vlaneseq
        %v1069 = vshrl.u32 %v1068, 7
        %v1070 = vsub.s32 %v1067, %v1069
        %v1071 = vrot.slane %v1049, %v1070
        %v1073 = vunpack.c.l.s4 1966171168
        %v1074 = vunpack.c.0.s8 %v1073
        %v1075 = vlaneseq
        %v1076 = vshrl.u32 %v1075, 7
        %v1077 = vsub.s32 %v1074, %v1076
        %v1078 = vrot.slane %v1050, %v1077
        %v1079 = vcombine.high %v1057, %v1057
        %v1080 = vcombine.high %v1064, %v1064
        %v1081 = vcombine.high %v1071, %v1071
        %v1082 = vcombine.high %v1078, %v1078
        %v1083 = vcombine.low %v1025, %v1027
        %v1084 = vcombine.high %v1025, %v1027
        %v1086 = vunpack.c.l.s4 1966171168
        %v1087 = vunpack.c.0.s8 %v1086
        %v1088 = vlaneseq
        %v1089 = vshrl.u32 %v1088, 7
        %v1090 = vsub.s32 %v1087, %v1089
        %v1091 = vrot.slane %v1083, %v1090
        %v1093 = vunpack.c.l.s4 1966171168
        %v1094 = vunpack.c.0.s8 %v1093
        %v1095 = vlaneseq
        %v1096 = vshrl.u32 %v1095, 7
        %v1097 = vsub.s32 %v1094, %v1096
        %v1098 = vrot.slane %v1084, %v1097
        %v1099 = vcombine.high %v1091, %v1091
        %v1100 = vcombine.high %v1098, %v1098
        %v1102 = vunpack.c.l.s4 1966171168
        %v1103 = vunpack.c.0.s8 %v1102
        %v1104 = vlaneseq
        %v1105 = vshrl.u32 %v1104, 7
        %v1106 = vsub.s32 %v1103, %v1105
        %v1107 = vrot.slane %v1091, %v1106
        %v1109 = vunpack.c.l.s4 1966171168
        %v1110 = vunpack.c.0.s8 %v1109
        %v1111 = vlaneseq
        %v1112 = vshrl.u32 %v1111, 7
        %v1113 = vsub.s32 %v1110, %v1112
        %v1114 = vrot.slane %v1098, %v1113
        %v1116 = vunpack.c.l.s4 1966171168
        %v1117 = vunpack.c.0.s8 %v1116
        %v1118 = vlaneseq
        %v1119 = vshrl.u32 %v1118, 7
        %v1120 = vsub.s32 %v1117, %v1119
        %v1121 = vrot.slane %v1099, %v1120
        %v1123 = vunpack.c.l.s4 1966171168
        %v1124 = vunpack.c.0.s8 %v1123
        %v1125 = vlaneseq
        %v1126 = vshrl.u32 %v1125, 7
        %v1127 = vsub.s32 %v1124, %v1126
        %v1128 = vrot.slane %v1100, %v1127
        %v1129 = vcombine.high %v1107, %v1107
        %v1130 = vcombine.high %v1114, %v1114
        %v1131 = vcombine.high %v1121, %v1121
        %v1132 = vcombine.high %v1128, %v1128
        %v1133 = vlaneseq
        %v1134 = vshrl.u32 %v1133, 7
        %v1135 = vsub.s32 0, %v1134
        %v1136 = vrot.slane %v1057, %v1135
        %v1137 = vlaneseq
        %v1138 = vshrl.u32 %v1137, 7
        %v1139 = vsub.s32 1, %v1138
        %v1140 = vrot.slane %v1057, %v1139
        %v1141 = vlaneseq
        %v1142 = vshrl.u32 %v1141, 7
        %v1143 = vsub.s32 0, %v1142
        %v1144 = vrot.slane %v1071, %v1143
        %v1145 = vlaneseq
        %v1146 = vshrl.u32 %v1145, 7
        %v1147 = vsub.s32 1, %v1146
        %v1148 = vrot.slane %v1071, %v1147
        %v1149 = vlaneseq
        %v1150 = vshrl.u32 %v1149, 7
        %v1151 = vsub.s32 0, %v1150
        %v1152 = vrot.slane %v1079, %v1151
        %v1153 = vlaneseq
        %v1154 = vshrl.u32 %v1153, 7
        %v1155 = vsub.s32 1, %v1154
        %v1156 = vrot.slane %v1079, %v1155
        %v1157 = vlaneseq
        %v1158 = vshrl.u32 %v1157, 7
        %v1159 = vsub.s32 0, %v1158
        %v1160 = vrot.slane %v1081, %v1159
        %v1161 = vlaneseq
        %v1162 = vshrl.u32 %v1161, 7
        %v1163 = vsub.s32 1, %v1162
        %v1164 = vrot.slane %v1081, %v1163
        %v1165 = vlaneseq
        %v1166 = vshrl.u32 %v1165, 7
        %v1167 = vsub.s32 0, %v1166
        %v1168 = vrot.slane %v1064, %v1167
        %v1169 = vlaneseq
        %v1170 = vshrl.u32 %v1169, 7
        %v1171 = vsub.s32 1, %v1170
        %v1172 = vrot.slane %v1064, %v1171
        %v1173 = vlaneseq
        %v1174 = vshrl.u32 %v1173, 7
        %v1175 = vsub.s32 0, %v1174
        %v1176 = vrot.slane %v1078, %v1175
        %v1177 = vlaneseq
        %v1178 = vshrl.u32 %v1177, 7
        %v1179 = vsub.s32 1, %v1178
        %v1180 = vrot.slane %v1078, %v1179
        %v1181 = vlaneseq
        %v1182 = vshrl.u32 %v1181, 7
        %v1183 = vsub.s32 0, %v1182
        %v1184 = vrot.slane %v1080, %v1183
        %v1185 = vlaneseq
        %v1186 = vshrl.u32 %v1185, 7
        %v1187 = vsub.s32 1, %v1186
        %v1188 = vrot.slane %v1080, %v1187
        %v1189 = vlaneseq
        %v1190 = vshrl.u32 %v1189, 7
        %v1191 = vsub.s32 0, %v1190
        %v1192 = vrot.slane %v1082, %v1191
        %v1193 = vlaneseq
        %v1194 = vshrl.u32 %v1193, 7
        %v1195 = vsub.s32 1, %v1194
        %v1196 = vrot.slane %v1082, %v1195
        %v1197 = vlaneseq
        %v1198 = vshrl.u32 %v1197, 7
        %v1199 = vsub.s32 0, %v1198
        %v1200 = vrot.slane %v1107, %v1199
        %v1201 = vlaneseq
        %v1202 = vshrl.u32 %v1201, 7
        %v1203 = vsub.s32 1, %v1202
        %v1204 = vrot.slane %v1107, %v1203
        %v1205 = vlaneseq
        %v1206 = vshrl.u32 %v1205, 7
        %v1207 = vsub.s32 0, %v1206
        %v1208 = vrot.slane %v1121, %v1207
        %v1209 = vlaneseq
        %v1210 = vshrl.u32 %v1209, 7
        %v1211 = vsub.s32 1, %v1210
        %v1212 = vrot.slane %v1121, %v1211
        %v1213 = vlaneseq
        %v1214 = vshrl.u32 %v1213, 7
        %v1215 = vsub.s32 0, %v1214
        %v1216 = vrot.slane %v1129, %v1215
        %v1217 = vlaneseq
        %v1218 = vshrl.u32 %v1217, 7
        %v1219 = vsub.s32 1, %v1218
        %v1220 = vrot.slane %v1129, %v1219
        %v1221 = vlaneseq
        %v1222 = vshrl.u32 %v1221, 7
        %v1223 = vsub.s32 0, %v1222
        %v1224 = vrot.slane %v1131, %v1223
        %v1225 = vlaneseq
        %v1226 = vshrl.u32 %v1225, 7
        %v1227 = vsub.s32 1, %v1226
        %v1228 = vrot.slane %v1131, %v1227
        %v1229 = vlaneseq
        %v1230 = vshrl.u32 %v1229, 7
        %v1231 = vsub.s32 0, %v1230
        %v1232 = vrot.slane %v1114, %v1231
        %v1233 = vlaneseq
        %v1234 = vshrl.u32 %v1233, 7
        %v1235 = vsub.s32 1, %v1234
        %v1236 = vrot.slane %v1114, %v1235
        %v1237 = vlaneseq
        %v1238 = vshrl.u32 %v1237, 7
        %v1239 = vsub.s32 0, %v1238
        %v1240 = vrot.slane %v1128, %v1239
        %v1241 = vlaneseq
        %v1242 = vshrl.u32 %v1241, 7
        %v1243 = vsub.s32 1, %v1242
        %v1244 = vrot.slane %v1128, %v1243
        %v1245 = vlaneseq
        %v1246 = vshrl.u32 %v1245, 7
        %v1247 = vsub.s32 0, %v1246
        %v1248 = vrot.slane %v1130, %v1247
        %v1249 = vlaneseq
        %v1250 = vshrl.u32 %v1249, 7
        %v1251 = vsub.s32 1, %v1250
        %v1252 = vrot.slane %v1130, %v1251
        %v1253 = vlaneseq
        %v1254 = vshrl.u32 %v1253, 7
        %v1255 = vsub.s32 0, %v1254
        %v1256 = vrot.slane %v1132, %v1255
        %v1257 = vlaneseq
        %v1258 = vshrl.u32 %v1257, 7
        %v1259 = vsub.s32 1, %v1258
        %v1260 = vrot.slane %v1132, %v1259
        %v1293 = vmul.f32 %v685, %v1136
        %v1294 = vmul.f32 %v686, %v1140
        %v1295 = vmul.f32 %v687, %v1136
        %v1296 = vmul.f32 %v688, %v1140
        %v1297 = vmul.f32 %v689, %v1136
        %v1298 = vmul.f32 %v690, %v1140
        %v1299 = vmul.f32 %v691, %v1136
        %v1300 = vmul.f32 %v692, %v1140
        %v1301 = vmul.f32 %v693, %v1144
        %v1302 = vmul.f32 %v694, %v1148
        %v1303 = vmul.f32 %v695, %v1144
        %v1304 = vmul.f32 %v696, %v1148
        %v1305 = vmul.f32 %v697, %v1144
        %v1306 = vmul.f32 %v698, %v1148
        %v1307 = vmul.f32 %v699, %v1144
        %v1308 = vmul.f32 %v700, %v1148
        %v1309 = vmul.f32 %v701, %v1152
        %v1310 = vmul.f32 %v702, %v1156
        %v1311 = vmul.f32 %v703, %v1152
        %v1312 = vmul.f32 %v704, %v1156
        %v1313 = vmul.f32 %v705, %v1152
        %v1314 = vmul.f32 %v706, %v1156
        %v1315 = vmul.f32 %v707, %v1152
        %v1316 = vmul.f32 %v708, %v1156
        %v1317 = vmul.f32 %v709, %v1160
        %v1318 = vmul.f32 %v710, %v1164
        %v1319 = vmul.f32 %v711, %v1160
        %v1320 = vmul.f32 %v712, %v1164
        %v1321 = vmul.f32 %v713, %v1160
        %v1322 = vmul.f32 %v714, %v1164
        %v1323 = vmul.f32 %v715, %v1160
        %v1324 = vmul.f32 %v716, %v1164
        %v1325 = vmul.f32 %v717, %v1168
        %v1326 = vmul.f32 %v718, %v1172
        %v1327 = vmul.f32 %v719, %v1168
        %v1328 = vmul.f32 %v720, %v1172
        %v1329 = vmul.f32 %v721, %v1168
        %v1330 = vmul.f32 %v722, %v1172
        %v1331 = vmul.f32 %v723, %v1168
        %v1332 = vmul.f32 %v724, %v1172
        %v1333 = vmul.f32 %v725, %v1176
        %v1334 = vmul.f32 %v726, %v1180
        %v1335 = vmul.f32 %v727, %v1176
        %v1336 = vmul.f32 %v728, %v1180
        %v1337 = vmul.f32 %v729, %v1176
        %v1338 = vmul.f32 %v730, %v1180
        %v1339 = vmul.f32 %v731, %v1176
        %v1340 = vmul.f32 %v732, %v1180
        %v1341 = vmul.f32 %v733, %v1184
        %v1342 = vmul.f32 %v734, %v1188
        %v1343 = vmul.f32 %v735, %v1184
        %v1344 = vmul.f32 %v736, %v1188
        %v1345 = vmul.f32 %v737, %v1184
        %v1346 = vmul.f32 %v738, %v1188
        %v1347 = vmul.f32 %v739, %v1184
        %v1348 = vmul.f32 %v740, %v1188
        %v1349 = vmul.f32 %v741, %v1192
        %v1350 = vmul.f32 %v742, %v1196
        %v1351 = vmul.f32 %v743, %v1192
        %v1352 = vmul.f32 %v744, %v1196
        %v1353 = vmul.f32 %v745, %v1192
        %v1354 = vmul.f32 %v746, %v1196
        %v1355 = vmul.f32 %v747, %v1192
        %v1356 = vmul.f32 %v748, %v1196
        %v1357 = vmul.f32 %v749, %v1200
        %v1358 = vmul.f32 %v750, %v1204
        %v1359 = vmul.f32 %v751, %v1200
        %v1360 = vmul.f32 %v752, %v1204
        %v1361 = vmul.f32 %v753, %v1200
        %v1362 = vmul.f32 %v754, %v1204
        %v1363 = vmul.f32 %v755, %v1200
        %v1364 = vmul.f32 %v756, %v1204
        %v1365 = vmul.f32 %v757, %v1208
        %v1366 = vmul.f32 %v758, %v1212
        %v1367 = vmul.f32 %v759, %v1208
        %v1368 = vmul.f32 %v760, %v1212
        %v1369 = vmul.f32 %v761, %v1208
        %v1370 = vmul.f32 %v762, %v1212
        %v1371 = vmul.f32 %v763, %v1208
        %v1372 = vmul.f32 %v764, %v1212
        %v1373 = vmul.f32 %v765, %v1216
        %v1374 = vmul.f32 %v766, %v1220
        %v1375 = vmul.f32 %v767, %v1216
        %v1376 = vmul.f32 %v768, %v1220
        %v1377 = vmul.f32 %v769, %v1216
        %v1378 = vmul.f32 %v770, %v1220
        %v1379 = vmul.f32 %v771, %v1216
        %v1380 = vmul.f32 %v772, %v1220
        %v1381 = vmul.f32 %v773, %v1224
        %v1382 = vmul.f32 %v774, %v1228
        %v1383 = vmul.f32 %v775, %v1224
        %v1384 = vmul.f32 %v776, %v1228
        %v1385 = vmul.f32 %v777, %v1224
        %v1386 = vmul.f32 %v778, %v1228
        %v1387 = vmul.f32 %v779, %v1224
        %v1388 = vmul.f32 %v780, %v1228
        %v1389 = vmul.f32 %v781, %v1232
        %v1390 = vmul.f32 %v782, %v1236
        %v1391 = vmul.f32 %v783, %v1232
        %v1392 = vmul.f32 %v784, %v1236
        %v1393 = vmul.f32 %v785, %v1232
        %v1394 = vmul.f32 %v786, %v1236
        %v1395 = vmul.f32 %v787, %v1232
        %v1396 = vmul.f32 %v788, %v1236
        %v1397 = vmul.f32 %v789, %v1240
        %v1398 = vmul.f32 %v790, %v1244
        %v1399 = vmul.f32 %v791, %v1240
        %v1400 = vmul.f32 %v792, %v1244
        %v1401 = vmul.f32 %v793, %v1240
        %v1402 = vmul.f32 %v794, %v1244
        %v1403 = vmul.f32 %v795, %v1240
        %v1404 = vmul.f32 %v796, %v1244
        %v1405 = vmul.f32 %v797, %v1248
        %v1406 = vmul.f32 %v798, %v1252
        %v1407 = vmul.f32 %v799, %v1248
        %v1408 = vmul.f32 %v800, %v1252
        %v1409 = vmul.f32 %v801, %v1248
        %v1410 = vmul.f32 %v802, %v1252
        %v1411 = vmul.f32 %v803, %v1248
        %v1412 = vmul.f32 %v804, %v1252
        %v1413 = vmul.f32 %v805, %v1256
        %v1414 = vmul.f32 %v806, %v1260
        %v1415 = vmul.f32 %v807, %v1256
        %v1416 = vmul.f32 %v808, %v1260
        %v1417 = vmul.f32 %v809, %v1256
        %v1418 = vmul.f32 %v810, %v1260
        %v1419 = vmul.f32 %v811, %v1256
        %v1420 = vmul.f32 %v812, %v1260
        %v1421 = vadd.f32 %v1293, %v1301
        %v1422 = vadd.f32 %v1421, %v1309
        %v1423 = vadd.f32 %v1422, %v1317
        %v1424 = vadd.f32 %v1423, %v1325
        %v1425 = vadd.f32 %v1424, %v1333
        %v1426 = vadd.f32 %v1425, %v1341
        %v1427 = vadd.f32 %v1426, %v1349
        %v1428 = vadd.f32 %v1427, %v1357
        %v1429 = vadd.f32 %v1428, %v1365
        %v1430 = vadd.f32 %v1429, %v1373
        %v1431 = vadd.f32 %v1430, %v1381
        %v1432 = vadd.f32 %v1431, %v1389
        %v1433 = vadd.f32 %v1432, %v1397
        %v1434 = vadd.f32 %v1433, %v1405
        %v1435 = vadd.f32 %v1434, %v1413
        %v1436 = vadd.f32 %v1294, %v1302
        %v1437 = vadd.f32 %v1436, %v1310
        %v1438 = vadd.f32 %v1437, %v1318
        %v1439 = vadd.f32 %v1438, %v1326
        %v1440 = vadd.f32 %v1439, %v1334
        %v1441 = vadd.f32 %v1440, %v1342
        %v1442 = vadd.f32 %v1441, %v1350
        %v1443 = vadd.f32 %v1442, %v1358
        %v1444 = vadd.f32 %v1443, %v1366
        %v1445 = vadd.f32 %v1444, %v1374
        %v1446 = vadd.f32 %v1445, %v1382
        %v1447 = vadd.f32 %v1446, %v1390
        %v1448 = vadd.f32 %v1447, %v1398
        %v1449 = vadd.f32 %v1448, %v1406
        %v1450 = vadd.f32 %v1449, %v1414
        %v1451 = vadd.f32 %v1295, %v1303
        %v1452 = vadd.f32 %v1451, %v1311
        %v1453 = vadd.f32 %v1452, %v1319
        %v1454 = vadd.f32 %v1453, %v1327
        %v1455 = vadd.f32 %v1454, %v1335
        %v1456 = vadd.f32 %v1455, %v1343
        %v1457 = vadd.f32 %v1456, %v1351
        %v1458 = vadd.f32 %v1457, %v1359
        %v1459 = vadd.f32 %v1458, %v1367
        %v1460 = vadd.f32 %v1459, %v1375
        %v1461 = vadd.f32 %v1460, %v1383
        %v1462 = vadd.f32 %v1461, %v1391
        %v1463 = vadd.f32 %v1462, %v1399
        %v1464 = vadd.f32 %v1463, %v1407
        %v1465 = vadd.f32 %v1464, %v1415
        %v1466 = vadd.f32 %v1296, %v1304
        %v1467 = vadd.f32 %v1466, %v1312
        %v1468 = vadd.f32 %v1467, %v1320
        %v1469 = vadd.f32 %v1468, %v1328
        %v1470 = vadd.f32 %v1469, %v1336
        %v1471 = vadd.f32 %v1470, %v1344
        %v1472 = vadd.f32 %v1471, %v1352
        %v1473 = vadd.f32 %v1472, %v1360
        %v1474 = vadd.f32 %v1473, %v1368
        %v1475 = vadd.f32 %v1474, %v1376
        %v1476 = vadd.f32 %v1475, %v1384
        %v1477 = vadd.f32 %v1476, %v1392
        %v1478 = vadd.f32 %v1477, %v1400
        %v1479 = vadd.f32 %v1478, %v1408
        %v1480 = vadd.f32 %v1479, %v1416
        %v1481 = vadd.f32 %v1297, %v1305
        %v1482 = vadd.f32 %v1481, %v1313
        %v1483 = vadd.f32 %v1482, %v1321
        %v1484 = vadd.f32 %v1483, %v1329
        %v1485 = vadd.f32 %v1484, %v1337
        %v1486 = vadd.f32 %v1485, %v1345
        %v1487 = vadd.f32 %v1486, %v1353
        %v1488 = vadd.f32 %v1487, %v1361
        %v1489 = vadd.f32 %v1488, %v1369
        %v1490 = vadd.f32 %v1489, %v1377
        %v1491 = vadd.f32 %v1490, %v1385
        %v1492 = vadd.f32 %v1491, %v1393
        %v1493 = vadd.f32 %v1492, %v1401
        %v1494 = vadd.f32 %v1493, %v1409
        %v1495 = vadd.f32 %v1494, %v1417
        %v1496 = vadd.f32 %v1298, %v1306
        %v1497 = vadd.f32 %v1496, %v1314
        %v1498 = vadd.f32 %v1497, %v1322
        %v1499 = vadd.f32 %v1498, %v1330
        %v1500 = vadd.f32 %v1499, %v1338
        %v1501 = vadd.f32 %v1500, %v1346
        %v1502 = vadd.f32 %v1501, %v1354
        %v1503 = vadd.f32 %v1502, %v1362
        %v1504 = vadd.f32 %v1503, %v1370
        %v1505 = vadd.f32 %v1504, %v1378
        %v1506 = vadd.f32 %v1505, %v1386
        %v1507 = vadd.f32 %v1506, %v1394
        %v1508 = vadd.f32 %v1507, %v1402
        %v1509 = vadd.f32 %v1508, %v1410
        %v1510 = vadd.f32 %v1509, %v1418
        %vm1511 = vcmask 1040384
        %v1512 = vsel %vm1511, %v1299, 0.0
        %v1513 = vsel %vm1511, %v1307, 0.0
        %v1514 = vadd.f32 %v1512, %v1513
        %v1515 = vsel %vm1511, %v1315, 0.0
        %v1516 = vadd.f32 %v1514, %v1515
        %v1517 = vsel %vm1511, %v1323, 0.0
        %v1518 = vadd.f32 %v1516, %v1517
        %v1519 = vsel %vm1511, %v1331, 0.0
        %v1520 = vadd.f32 %v1518, %v1519
        %v1521 = vsel %vm1511, %v1339, 0.0
        %v1522 = vadd.f32 %v1520, %v1521
        %v1523 = vsel %vm1511, %v1347, 0.0
        %v1524 = vadd.f32 %v1522, %v1523
        %v1525 = vsel %vm1511, %v1355, 0.0
        %v1526 = vadd.f32 %v1524, %v1525
        %v1527 = vsel %vm1511, %v1363, 0.0
        %v1528 = vadd.f32 %v1526, %v1527
        %v1529 = vsel %vm1511, %v1371, 0.0
        %v1530 = vadd.f32 %v1528, %v1529
        %v1531 = vsel %vm1511, %v1379, 0.0
        %v1532 = vadd.f32 %v1530, %v1531
        %v1533 = vsel %vm1511, %v1387, 0.0
        %v1534 = vadd.f32 %v1532, %v1533
        %v1535 = vsel %vm1511, %v1395, 0.0
        %v1536 = vadd.f32 %v1534, %v1535
        %v1537 = vsel %vm1511, %v1403, 0.0
        %v1538 = vadd.f32 %v1536, %v1537
        %v1539 = vsel %vm1511, %v1411, 0.0
        %v1540 = vadd.f32 %v1538, %v1539
        %v1541 = vsel %vm1511, %v1419, 0.0
        %v1542 = vadd.f32 %v1540, %v1541
        %v1543 = vsel %vm1511, %v1300, 0.0
        %v1544 = vsel %vm1511, %v1308, 0.0
        %v1545 = vadd.f32 %v1543, %v1544
        %v1546 = vsel %vm1511, %v1316, 0.0
        %v1547 = vadd.f32 %v1545, %v1546
        %v1548 = vsel %vm1511, %v1324, 0.0
        %v1549 = vadd.f32 %v1547, %v1548
        %v1550 = vsel %vm1511, %v1332, 0.0
        %v1551 = vadd.f32 %v1549, %v1550
        %v1552 = vsel %vm1511, %v1340, 0.0
        %v1553 = vadd.f32 %v1551, %v1552
        %v1554 = vsel %vm1511, %v1348, 0.0
        %v1555 = vadd.f32 %v1553, %v1554
        %v1556 = vsel %vm1511, %v1356, 0.0
        %v1557 = vadd.f32 %v1555, %v1556
        %v1558 = vsel %vm1511, %v1364, 0.0
        %v1559 = vadd.f32 %v1557, %v1558
        %v1560 = vsel %vm1511, %v1372, 0.0
        %v1561 = vadd.f32 %v1559, %v1560
        %v1562 = vsel %vm1511, %v1380, 0.0
        %v1563 = vadd.f32 %v1561, %v1562
        %v1564 = vsel %vm1511, %v1388, 0.0
        %v1565 = vadd.f32 %v1563, %v1564
        %v1566 = vsel %vm1511, %v1396, 0.0
        %v1567 = vadd.f32 %v1565, %v1566
        %v1568 = vsel %vm1511, %v1404, 0.0
        %v1569 = vadd.f32 %v1567, %v1568
        %v1570 = vsel %vm1511, %v1412, 0.0
        %v1571 = vadd.f32 %v1569, %v1570
        %v1572 = vsel %vm1511, %v1420, 0.0
        %v1573 = vadd.f32 %v1571, %v1572
        %v1574 = vld [vmem:[%s5] sm:$0xff]
        %v1575 = vld [vmem:[%s5 + $0x8] sm:$0xff]
        %v1576 = vld [vmem:[%s5 + $0x10] sm:$0xff]
        %v1577 = vld [vmem:[%s5 + $0x18] sm:$0x1]
        %v1579 = vsel %vm945, %v1574, 0
        %v1582 = vsel %vm945, %v1575, 0
        %v1585 = vsel %vm945, %v1576, 0
        %v1588 = vsel %vm945, %v1577, 0
        %1590 = vmatprep.subr.mxu0 0.0
        %1591 = vmatpush1.msra.mxu0 0.0
        %1592 = vmatprep.subr.mxu0 0.0
        %1593 = vmatpush1.msra.mxu0 0.0
        %1594 = vmatprep.subr.mxu0 0.0
        %1595 = vmatpush1.msra.mxu0 0.0
        %1596 = vmatprep.subr.mxu0 0.0
        %1597 = vmatpush1.msra.mxu0 0.0
        %1598 = vmatprep.subr.mxu0 0.0
        %1599 = vmatpush1.msra.mxu0 0.0
        %1600 = vmatprep.subr.mxu0 0.0
        %1601 = vmatpush1.msra.mxu0 0.0
        %1602 = vmatprep.subr.mxu0 0.0
        %1603 = vmatpush1.msra.mxu0 0.0
        %1604 = vmatprep.subr.mxu0 0.0
        %1605 = vmatpush1.msra.mxu0 0.0
        %1606 = vmatprep.subr.mxu0 0.0
        %1607 = vmatpush1.msra.mxu0 0.0
        %1608 = vmatprep.subr.mxu0 0.0
        %1609 = vmatpush1.msra.mxu0 0.0
        %1610 = vmatprep.subr.mxu0 0.0
        %1611 = vmatpush1.msra.mxu0 0.0
        %1612 = vmatprep.subr.mxu0 0.0
        %1613 = vmatpush1.msra.mxu0 0.0
        %1614 = vmatprep.subr.mxu0 %v941
        %1615 = vmatpush1.msra.mxu0 %v939
        %1616 = vmatprep.subr.mxu0 %v935
        %1617 = vmatpush1.msra.mxu0 %v933
        %1618 = vmatprep.subr.mxu0 %v929
        %1619 = vmatpush1.msra.mxu0 %v927
        %1620 = vmatprep.subr.mxu0 %v923
        %1621 = vmatpush1.msra.mxu0 %v921
        %1622 = vmatprep.subr.mxu0 0.0
        %1623 = vmatpush2.msra.mxu0 0.0
        %1624 = vmatprep.subr.mxu0 0.0
        %1625 = vmatpush2.msra.mxu0 0.0
        %1626 = vmatprep.subr.mxu0 0.0
        %1627 = vmatpush2.msra.mxu0 0.0
        %1628 = vmatprep.subr.mxu0 0.0
        %1629 = vmatpush2.msra.mxu0 0.0
        %1630 = vmatprep.subr.mxu0 0.0
        %1631 = vmatpush2.msra.mxu0 0.0
        %1632 = vmatprep.subr.mxu0 0.0
        %1633 = vmatpush2.msra.mxu0 0.0
        %1634 = vmatprep.subr.mxu0 0.0
        %1635 = vmatpush2.msra.mxu0 0.0
        %1636 = vmatprep.subr.mxu0 0.0
        %1637 = vmatpush2.msra.mxu0 0.0
        %1638 = vmatprep.subr.mxu0 0.0
        %1639 = vmatpush2.msra.mxu0 0.0
        %1640 = vmatprep.subr.mxu0 0.0
        %1641 = vmatpush2.msra.mxu0 0.0
        %1642 = vmatprep.subr.mxu0 0.0
        %1643 = vmatpush2.msra.mxu0 0.0
        %1644 = vmatprep.subr.mxu0 0.0
        %1645 = vmatpush2.msra.mxu0 0.0
        %1646 = vmatprep.subr.mxu0 0.0
        %1647 = vmatpush2.msra.mxu0 0.0
        %1648 = vmatprep.subr.mxu0 0.0
        %1649 = vmatpush2.msra.mxu0 0.0
        %1650 = vmatprep.subr.mxu0 0.0
        %1651 = vmatpush2.msra.mxu0 0.0
        %1652 = vmatprep.subr.mxu0 0.0
        %1653 = vmatpush2.msra.mxu0 0.0
        %1654 = vmatprep.mubr.f32.mxu0 0.0
        %1655 = vmatmul.mubr.f32.gmra.mxu0 %v1579
        %v1656 = vpop.f32.mrf.mxu0
        %v1657 = vadd.f32 0.0, %v1656
        %v1658 = vpop.f32.mrf.mxu0
        %v1659 = vadd.f32 0.0, %v1658
        %1660 = vmatprep.mubr.f32.mxu0 0.0
        %1661 = vmatmul.mubr.f32.gmra.mxu0 %v1582
        %v1662 = vpop.f32.mrf.mxu0
        %v1663 = vadd.f32 0.0, %v1662
        %v1664 = vpop.f32.mrf.mxu0
        %v1665 = vadd.f32 0.0, %v1664
        %1666 = vmatprep.mubr.f32.mxu0 0.0
        %1667 = vmatmul.mubr.f32.gmra.mxu0 %v1585
        %v1668 = vpop.f32.mrf.mxu0
        %v1669 = vadd.f32 0.0, %v1668
        %v1670 = vpop.f32.mrf.mxu0
        %v1671 = vadd.f32 0.0, %v1670
        %1672 = vmatprep.mubr.f32.mxu0 0.0
        %1673 = vmatmul.mubr.f32.gmra.mxu0 %v1588
        %v1674 = vpop.f32.mrf.mxu0
        %v1675 = vadd.f32 0.0, %v1674
        %v1676 = vpop.f32.mrf.mxu0
        %v1677 = vadd.f32 0.0, %v1676
        %1678 = vdwg.mxu0
        %v1679 = vadd.f32 %v1435, %v1657
        %v1680 = vadd.f32 %v1450, %v1659
        %v1681 = vadd.f32 %v1465, %v1663
        %v1682 = vadd.f32 %v1480, %v1665
        %v1683 = vadd.f32 %v1495, %v1669
        %v1684 = vadd.f32 %v1510, %v1671
        %v1685 = vadd.f32 %v1542, %v1675
        %v1686 = vadd.f32 %v1573, %v1677
        %v1687 = vmax.f32 %v1679, %v1683
        %v1688 = vsel %vm1511, %v1685, -inf
        %v1689 = vmax.f32 %v1681, %v1688
        %v1690 = vmax.f32 %v1687, %v1689
        %v1691 = vrot.slane %v1690, 4
        %v1692 = vmax.f32 %v1690, %v1691
        %v1693 = vrot.slane %v1692, 2
        %v1694 = vmax.f32 %v1692, %v1693
        %v1695 = vrot.slane %v1694, 1
        %v1696 = vmax.f32 %v1694, %v1695
        %v1697 = vmax.f32 %v1680, %v1684
        %v1698 = vsel %vm1511, %v1686, -inf
        %v1699 = vmax.f32 %v1682, %v1698
        %v1700 = vmax.f32 %v1697, %v1699
        %v1701 = vrot.slane %v1700, 4
        %v1702 = vmax.f32 %v1700, %v1701
        %v1703 = vrot.slane %v1702, 2
        %v1704 = vmax.f32 %v1702, %v1703
        %v1705 = vrot.slane %v1704, 1
        %v1706 = vmax.f32 %v1704, %v1705
        %v1707 = vsub.f32 %v1679, %v1696
        %v1708 = vsub.f32 %v1680, %v1706
        %v1709 = vsub.f32 %v1681, %v1696
        %v1710 = vsub.f32 %v1682, %v1706
        %v1711 = vsub.f32 %v1683, %v1696
        %v1712 = vsub.f32 %v1684, %v1706
        %v1713 = vsub.f32 %v1685, %v1696
        %v1714 = vsub.f32 %v1686, %v1706
        %v1715 = vmul.f32 %v1707, 1.442695
        %v1716 = vpow.pop %v1715
        %v1717 = vmul.f32 %v1708, 1.442695
        %v1718 = vpow.pop %v1717
        %v1719 = vmul.f32 %v1709, 1.442695
        %v1720 = vpow.pop %v1719
        %v1721 = vmul.f32 %v1710, 1.442695
        %v1722 = vpow.pop %v1721
        %v1723 = vmul.f32 %v1711, 1.442695
        %v1724 = vpow.pop %v1723
        %v1725 = vmul.f32 %v1712, 1.442695
        %v1726 = vpow.pop %v1725
        %v1727 = vmul.f32 %v1713, 1.442695
        %v1728 = vpow.pop %v1727
        %v1729 = vmul.f32 %v1714, 1.442695
        %v1730 = vpow.pop %v1729
        %v1731 = vadd.f32 %v1716, %v1720
        %v1732 = vadd.f32 %v1731, %v1724
        %v1733 = vsel %vm1511, %v1728, 0.0
        %v1734 = vadd.f32 %v1732, %v1733
        %v1735 = vrot.slane %v1734, 4
        %v1736 = vadd.f32 %v1734, %v1735
        %v1737 = vrot.slane %v1736, 2
        %v1738 = vadd.f32 %v1736, %v1737
        %v1739 = vrot.slane %v1738, 1
        %v1740 = vadd.f32 %v1738, %v1739
        %v1741 = vadd.f32 %v1718, %v1722
        %v1742 = vadd.f32 %v1741, %v1726
        %v1743 = vsel %vm1511, %v1730, 0.0
        %v1744 = vadd.f32 %v1742, %v1743
        %v1745 = vrot.slane %v1744, 4
        %v1746 = vadd.f32 %v1744, %v1745
        %v1747 = vrot.slane %v1746, 2
        %v1748 = vadd.f32 %v1746, %v1747
        %v1749 = vrot.slane %v1748, 1
        %v1750 = vadd.f32 %v1748, %v1749
        %v1751 = vrcp.pop %v1740
        %v1752 = vmul.f32 %v1716, %v1751
        %v1753 = vrcp.pop %v1750
        %v1754 = vmul.f32 %v1718, %v1753
        %v1755 = vmul.f32 %v1720, %v1751
        %v1756 = vmul.f32 %v1722, %v1753
        %v1757 = vmul.f32 %v1724, %v1751
        %v1758 = vmul.f32 %v1726, %v1753
        %v1759 = vmul.f32 %v1728, %v1751
        %v1760 = vmul.f32 %v1730, %v1753
        %v1761 = vmul.f32 %v1752, %v685
        %v1762 = vmul.f32 %v1754, %v686
        %v1763 = vmul.f32 %v1755, %v687
        %v1764 = vmul.f32 %v1756, %v688
        %v1765 = vmul.f32 %v1757, %v689
        %v1766 = vmul.f32 %v1758, %v690
        %v1767 = vmul.f32 %v1759, %v691
        %v1768 = vmul.f32 %v1760, %v692
        %v1769 = vmul.f32 %v1752, %v693
        %v1770 = vmul.f32 %v1754, %v694
        %v1771 = vmul.f32 %v1755, %v695
        %v1772 = vmul.f32 %v1756, %v696
        %v1773 = vmul.f32 %v1757, %v697
        %v1774 = vmul.f32 %v1758, %v698
        %v1775 = vmul.f32 %v1759, %v699
        %v1776 = vmul.f32 %v1760, %v700
        %v1777 = vmul.f32 %v1752, %v701
        %v1778 = vmul.f32 %v1754, %v702
        %v1779 = vmul.f32 %v1755, %v703
        %v1780 = vmul.f32 %v1756, %v704
        %v1781 = vmul.f32 %v1757, %v705
        %v1782 = vmul.f32 %v1758, %v706
        %v1783 = vmul.f32 %v1759, %v707
        %v1784 = vmul.f32 %v1760, %v708
        %v1785 = vmul.f32 %v1752, %v709
        %v1786 = vmul.f32 %v1754, %v710
        %v1787 = vmul.f32 %v1755, %v711
        %v1788 = vmul.f32 %v1756, %v712
        %v1789 = vmul.f32 %v1757, %v713
        %v1790 = vmul.f32 %v1758, %v714
        %v1791 = vmul.f32 %v1759, %v715
        %v1792 = vmul.f32 %v1760, %v716
        %v1793 = vmul.f32 %v1752, %v717
        %v1794 = vmul.f32 %v1754, %v718
        %v1795 = vmul.f32 %v1755, %v719
        %v1796 = vmul.f32 %v1756, %v720
        %v1797 = vmul.f32 %v1757, %v721
        %v1798 = vmul.f32 %v1758, %v722
        %v1799 = vmul.f32 %v1759, %v723
        %v1800 = vmul.f32 %v1760, %v724
        %v1801 = vmul.f32 %v1752, %v725
        %v1802 = vmul.f32 %v1754, %v726
        %v1803 = vmul.f32 %v1755, %v727
        %v1804 = vmul.f32 %v1756, %v728
        %v1805 = vmul.f32 %v1757, %v729
        %v1806 = vmul.f32 %v1758, %v730
        %v1807 = vmul.f32 %v1759, %v731
        %v1808 = vmul.f32 %v1760, %v732
        %v1809 = vmul.f32 %v1752, %v733
        %v1810 = vmul.f32 %v1754, %v734
        %v1811 = vmul.f32 %v1755, %v735
        %v1812 = vmul.f32 %v1756, %v736
        %v1813 = vmul.f32 %v1757, %v737
        %v1814 = vmul.f32 %v1758, %v738
        %v1815 = vmul.f32 %v1759, %v739
        %v1816 = vmul.f32 %v1760, %v740
        %v1817 = vmul.f32 %v1752, %v741
        %v1818 = vmul.f32 %v1754, %v742
        %v1819 = vmul.f32 %v1755, %v743
        %v1820 = vmul.f32 %v1756, %v744
        %v1821 = vmul.f32 %v1757, %v745
        %v1822 = vmul.f32 %v1758, %v746
        %v1823 = vmul.f32 %v1759, %v747
        %v1824 = vmul.f32 %v1760, %v748
        %v1825 = vmul.f32 %v1752, %v749
        %v1826 = vmul.f32 %v1754, %v750
        %v1827 = vmul.f32 %v1755, %v751
        %v1828 = vmul.f32 %v1756, %v752
        %v1829 = vmul.f32 %v1757, %v753
        %v1830 = vmul.f32 %v1758, %v754
        %v1831 = vmul.f32 %v1759, %v755
        %v1832 = vmul.f32 %v1760, %v756
        %v1833 = vmul.f32 %v1752, %v757
        %v1834 = vmul.f32 %v1754, %v758
        %v1835 = vmul.f32 %v1755, %v759
        %v1836 = vmul.f32 %v1756, %v760
        %v1837 = vmul.f32 %v1757, %v761
        %v1838 = vmul.f32 %v1758, %v762
        %v1839 = vmul.f32 %v1759, %v763
        %v1840 = vmul.f32 %v1760, %v764
        %v1841 = vmul.f32 %v1752, %v765
        %v1842 = vmul.f32 %v1754, %v766
        %v1843 = vmul.f32 %v1755, %v767
        %v1844 = vmul.f32 %v1756, %v768
        %v1845 = vmul.f32 %v1757, %v769
        %v1846 = vmul.f32 %v1758, %v770
        %v1847 = vmul.f32 %v1759, %v771
        %v1848 = vmul.f32 %v1760, %v772
        %v1849 = vmul.f32 %v1752, %v773
        %v1850 = vmul.f32 %v1754, %v774
        %v1851 = vmul.f32 %v1755, %v775
        %v1852 = vmul.f32 %v1756, %v776
        %v1853 = vmul.f32 %v1757, %v777
        %v1854 = vmul.f32 %v1758, %v778
        %v1855 = vmul.f32 %v1759, %v779
        %v1856 = vmul.f32 %v1760, %v780
        %v1857 = vmul.f32 %v1752, %v781
        %v1858 = vmul.f32 %v1754, %v782
        %v1859 = vmul.f32 %v1755, %v783
        %v1860 = vmul.f32 %v1756, %v784
        %v1861 = vmul.f32 %v1757, %v785
        %v1862 = vmul.f32 %v1758, %v786
        %v1863 = vmul.f32 %v1759, %v787
        %v1864 = vmul.f32 %v1760, %v788
        %v1865 = vmul.f32 %v1752, %v789
        %v1866 = vmul.f32 %v1754, %v790
        %v1867 = vmul.f32 %v1755, %v791
        %v1868 = vmul.f32 %v1756, %v792
        %v1869 = vmul.f32 %v1757, %v793
        %v1870 = vmul.f32 %v1758, %v794
        %v1871 = vmul.f32 %v1759, %v795
        %v1872 = vmul.f32 %v1760, %v796
        %v1873 = vmul.f32 %v1752, %v797
        %v1874 = vmul.f32 %v1754, %v798
        %v1875 = vmul.f32 %v1755, %v799
        %v1876 = vmul.f32 %v1756, %v800
        %v1877 = vmul.f32 %v1757, %v801
        %v1878 = vmul.f32 %v1758, %v802
        %v1879 = vmul.f32 %v1759, %v803
        %v1880 = vmul.f32 %v1760, %v804
        %v1881 = vmul.f32 %v1752, %v805
        %v1882 = vmul.f32 %v1754, %v806
        %v1883 = vmul.f32 %v1755, %v807
        %v1884 = vmul.f32 %v1756, %v808
        %v1885 = vmul.f32 %v1757, %v809
        %v1886 = vmul.f32 %v1758, %v810
        %v1887 = vmul.f32 %v1759, %v811
        %v1888 = vmul.f32 %v1760, %v812
        %v1889 = vadd.f32 %v1761, %v1763
        %v1890 = vadd.f32 %v1889, %v1765
        %v1891 = vsel %vm1511, %v1767, 0.0
        %v1892 = vadd.f32 %v1890, %v1891
        %v1893 = vrot.slane %v1892, 4
        %v1894 = vadd.f32 %v1892, %v1893
        %v1895 = vrot.slane %v1894, 2
        %v1896 = vadd.f32 %v1894, %v1895
        %v1897 = vrot.slane %v1896, 1
        %v1898 = vadd.f32 %v1896, %v1897
        %v1899 = vadd.f32 %v1762, %v1764
        %v1900 = vadd.f32 %v1899, %v1766
        %v1901 = vsel %vm1511, %v1768, 0.0
        %v1902 = vadd.f32 %v1900, %v1901
        %v1903 = vrot.slane %v1902, 4
        %v1904 = vadd.f32 %v1902, %v1903
        %v1905 = vrot.slane %v1904, 2
        %v1906 = vadd.f32 %v1904, %v1905
        %v1907 = vrot.slane %v1906, 1
        %v1908 = vadd.f32 %v1906, %v1907
        %v1909 = vadd.f32 %v1769, %v1771
        %v1910 = vadd.f32 %v1909, %v1773
        %v1911 = vsel %vm1511, %v1775, 0.0
        %v1912 = vadd.f32 %v1910, %v1911
        %v1913 = vrot.slane %v1912, 4
        %v1914 = vadd.f32 %v1912, %v1913
        %v1915 = vrot.slane %v1914, 2
        %v1916 = vadd.f32 %v1914, %v1915
        %v1917 = vrot.slane %v1916, 1
        %v1918 = vadd.f32 %v1916, %v1917
        %v1919 = vadd.f32 %v1770, %v1772
        %v1920 = vadd.f32 %v1919, %v1774
        %v1921 = vsel %vm1511, %v1776, 0.0
        %v1922 = vadd.f32 %v1920, %v1921
        %v1923 = vrot.slane %v1922, 4
        %v1924 = vadd.f32 %v1922, %v1923
        %v1925 = vrot.slane %v1924, 2
        %v1926 = vadd.f32 %v1924, %v1925
        %v1927 = vrot.slane %v1926, 1
        %v1928 = vadd.f32 %v1926, %v1927
        %v1929 = vadd.f32 %v1777, %v1779
        %v1930 = vadd.f32 %v1929, %v1781
        %v1931 = vsel %vm1511, %v1783, 0.0
        %v1932 = vadd.f32 %v1930, %v1931
        %v1933 = vrot.slane %v1932, 4
        %v1934 = vadd.f32 %v1932, %v1933
        %v1935 = vrot.slane %v1934, 2
        %v1936 = vadd.f32 %v1934, %v1935
        %v1937 = vrot.slane %v1936, 1
        %v1938 = vadd.f32 %v1936, %v1937
        %v1939 = vadd.f32 %v1778, %v1780
        %v1940 = vadd.f32 %v1939, %v1782
        %v1941 = vsel %vm1511, %v1784, 0.0
        %v1942 = vadd.f32 %v1940, %v1941
        %v1943 = vrot.slane %v1942, 4
        %v1944 = vadd.f32 %v1942, %v1943
        %v1945 = vrot.slane %v1944, 2
        %v1946 = vadd.f32 %v1944, %v1945
        %v1947 = vrot.slane %v1946, 1
        %v1948 = vadd.f32 %v1946, %v1947
        %v1949 = vadd.f32 %v1785, %v1787
        %v1950 = vadd.f32 %v1949, %v1789
        %v1951 = vsel %vm1511, %v1791, 0.0
        %v1952 = vadd.f32 %v1950, %v1951
        %v1953 = vrot.slane %v1952, 4
        %v1954 = vadd.f32 %v1952, %v1953
        %v1955 = vrot.slane %v1954, 2
        %v1956 = vadd.f32 %v1954, %v1955
        %v1957 = vrot.slane %v1956, 1
        %v1958 = vadd.f32 %v1956, %v1957
        %v1959 = vadd.f32 %v1786, %v1788
        %v1960 = vadd.f32 %v1959, %v1790
        %v1961 = vsel %vm1511, %v1792, 0.0
        %v1962 = vadd.f32 %v1960, %v1961
        %v1963 = vrot.slane %v1962, 4
        %v1964 = vadd.f32 %v1962, %v1963
        %v1965 = vrot.slane %v1964, 2
        %v1966 = vadd.f32 %v1964, %v1965
        %v1967 = vrot.slane %v1966, 1
        %v1968 = vadd.f32 %v1966, %v1967
        %v1969 = vadd.f32 %v1793, %v1795
        %v1970 = vadd.f32 %v1969, %v1797
        %v1971 = vsel %vm1511, %v1799, 0.0
        %v1972 = vadd.f32 %v1970, %v1971
        %v1973 = vrot.slane %v1972, 4
        %v1974 = vadd.f32 %v1972, %v1973
        %v1975 = vrot.slane %v1974, 2
        %v1976 = vadd.f32 %v1974, %v1975
        %v1977 = vrot.slane %v1976, 1
        %v1978 = vadd.f32 %v1976, %v1977
        %v1979 = vadd.f32 %v1794, %v1796
        %v1980 = vadd.f32 %v1979, %v1798
        %v1981 = vsel %vm1511, %v1800, 0.0
        %v1982 = vadd.f32 %v1980, %v1981
        %v1983 = vrot.slane %v1982, 4
        %v1984 = vadd.f32 %v1982, %v1983
        %v1985 = vrot.slane %v1984, 2
        %v1986 = vadd.f32 %v1984, %v1985
        %v1987 = vrot.slane %v1986, 1
        %v1988 = vadd.f32 %v1986, %v1987
        %v1989 = vadd.f32 %v1801, %v1803
        %v1990 = vadd.f32 %v1989, %v1805
        %v1991 = vsel %vm1511, %v1807, 0.0
        %v1992 = vadd.f32 %v1990, %v1991
        %v1993 = vrot.slane %v1992, 4
        %v1994 = vadd.f32 %v1992, %v1993
        %v1995 = vrot.slane %v1994, 2
        %v1996 = vadd.f32 %v1994, %v1995
        %v1997 = vrot.slane %v1996, 1
        %v1998 = vadd.f32 %v1996, %v1997
        %v1999 = vadd.f32 %v1802, %v1804
        %v2000 = vadd.f32 %v1999, %v1806
        %v2001 = vsel %vm1511, %v1808, 0.0
        %v2002 = vadd.f32 %v2000, %v2001
        %v2003 = vrot.slane %v2002, 4
        %v2004 = vadd.f32 %v2002, %v2003
        %v2005 = vrot.slane %v2004, 2
        %v2006 = vadd.f32 %v2004, %v2005
        %v2007 = vrot.slane %v2006, 1
        %v2008 = vadd.f32 %v2006, %v2007
        %v2009 = vadd.f32 %v1809, %v1811
        %v2010 = vadd.f32 %v2009, %v1813
        %v2011 = vsel %vm1511, %v1815, 0.0
        %v2012 = vadd.f32 %v2010, %v2011
        %v2013 = vrot.slane %v2012, 4
        %v2014 = vadd.f32 %v2012, %v2013
        %v2015 = vrot.slane %v2014, 2
        %v2016 = vadd.f32 %v2014, %v2015
        %v2017 = vrot.slane %v2016, 1
        %v2018 = vadd.f32 %v2016, %v2017
        %v2019 = vadd.f32 %v1810, %v1812
        %v2020 = vadd.f32 %v2019, %v1814
        %v2021 = vsel %vm1511, %v1816, 0.0
        %v2022 = vadd.f32 %v2020, %v2021
        %v2023 = vrot.slane %v2022, 4
        %v2024 = vadd.f32 %v2022, %v2023
        %v2025 = vrot.slane %v2024, 2
        %v2026 = vadd.f32 %v2024, %v2025
        %v2027 = vrot.slane %v2026, 1
        %v2028 = vadd.f32 %v2026, %v2027
        %v2029 = vadd.f32 %v1817, %v1819
        %v2030 = vadd.f32 %v2029, %v1821
        %v2031 = vsel %vm1511, %v1823, 0.0
        %v2032 = vadd.f32 %v2030, %v2031
        %v2033 = vrot.slane %v2032, 4
        %v2034 = vadd.f32 %v2032, %v2033
        %v2035 = vrot.slane %v2034, 2
        %v2036 = vadd.f32 %v2034, %v2035
        %v2037 = vrot.slane %v2036, 1
        %v2038 = vadd.f32 %v2036, %v2037
        %v2039 = vadd.f32 %v1818, %v1820
        %v2040 = vadd.f32 %v2039, %v1822
        %v2041 = vsel %vm1511, %v1824, 0.0
        %v2042 = vadd.f32 %v2040, %v2041
        %v2043 = vrot.slane %v2042, 4
        %v2044 = vadd.f32 %v2042, %v2043
        %v2045 = vrot.slane %v2044, 2
        %v2046 = vadd.f32 %v2044, %v2045
        %v2047 = vrot.slane %v2046, 1
        %v2048 = vadd.f32 %v2046, %v2047
        %v2049 = vadd.f32 %v1825, %v1827
        %v2050 = vadd.f32 %v2049, %v1829
        %v2051 = vsel %vm1511, %v1831, 0.0
        %v2052 = vadd.f32 %v2050, %v2051
        %v2053 = vrot.slane %v2052, 4
        %v2054 = vadd.f32 %v2052, %v2053
        %v2055 = vrot.slane %v2054, 2
        %v2056 = vadd.f32 %v2054, %v2055
        %v2057 = vrot.slane %v2056, 1
        %v2058 = vadd.f32 %v2056, %v2057
        %v2059 = vadd.f32 %v1826, %v1828
        %v2060 = vadd.f32 %v2059, %v1830
        %v2061 = vsel %vm1511, %v1832, 0.0
        %v2062 = vadd.f32 %v2060, %v2061
        %v2063 = vrot.slane %v2062, 4
        %v2064 = vadd.f32 %v2062, %v2063
        %v2065 = vrot.slane %v2064, 2
        %v2066 = vadd.f32 %v2064, %v2065
        %v2067 = vrot.slane %v2066, 1
        %v2068 = vadd.f32 %v2066, %v2067
        %v2069 = vadd.f32 %v1833, %v1835
        %v2070 = vadd.f32 %v2069, %v1837
        %v2071 = vsel %vm1511, %v1839, 0.0
        %v2072 = vadd.f32 %v2070, %v2071
        %v2073 = vrot.slane %v2072, 4
        %v2074 = vadd.f32 %v2072, %v2073
        %v2075 = vrot.slane %v2074, 2
        %v2076 = vadd.f32 %v2074, %v2075
        %v2077 = vrot.slane %v2076, 1
        %v2078 = vadd.f32 %v2076, %v2077
        %v2079 = vadd.f32 %v1834, %v1836
        %v2080 = vadd.f32 %v2079, %v1838
        %v2081 = vsel %vm1511, %v1840, 0.0
        %v2082 = vadd.f32 %v2080, %v2081
        %v2083 = vrot.slane %v2082, 4
        %v2084 = vadd.f32 %v2082, %v2083
        %v2085 = vrot.slane %v2084, 2
        %v2086 = vadd.f32 %v2084, %v2085
        %v2087 = vrot.slane %v2086, 1
        %v2088 = vadd.f32 %v2086, %v2087
        %v2089 = vadd.f32 %v1841, %v1843
        %v2090 = vadd.f32 %v2089, %v1845
        %v2091 = vsel %vm1511, %v1847, 0.0
        %v2092 = vadd.f32 %v2090, %v2091
        %v2093 = vrot.slane %v2092, 4
        %v2094 = vadd.f32 %v2092, %v2093
        %v2095 = vrot.slane %v2094, 2
        %v2096 = vadd.f32 %v2094, %v2095
        %v2097 = vrot.slane %v2096, 1
        %v2098 = vadd.f32 %v2096, %v2097
        %v2099 = vadd.f32 %v1842, %v1844
        %v2100 = vadd.f32 %v2099, %v1846
        %v2101 = vsel %vm1511, %v1848, 0.0
        %v2102 = vadd.f32 %v2100, %v2101
        %v2103 = vrot.slane %v2102, 4
        %v2104 = vadd.f32 %v2102, %v2103
        %v2105 = vrot.slane %v2104, 2
        %v2106 = vadd.f32 %v2104, %v2105
        %v2107 = vrot.slane %v2106, 1
        %v2108 = vadd.f32 %v2106, %v2107
        %v2109 = vadd.f32 %v1849, %v1851
        %v2110 = vadd.f32 %v2109, %v1853
        %v2111 = vsel %vm1511, %v1855, 0.0
        %v2112 = vadd.f32 %v2110, %v2111
        %v2113 = vrot.slane %v2112, 4
        %v2114 = vadd.f32 %v2112, %v2113
        %v2115 = vrot.slane %v2114, 2
        %v2116 = vadd.f32 %v2114, %v2115
        %v2117 = vrot.slane %v2116, 1
        %v2118 = vadd.f32 %v2116, %v2117
        %v2119 = vadd.f32 %v1850, %v1852
        %v2120 = vadd.f32 %v2119, %v1854
        %v2121 = vsel %vm1511, %v1856, 0.0
        %v2122 = vadd.f32 %v2120, %v2121
        %v2123 = vrot.slane %v2122, 4
        %v2124 = vadd.f32 %v2122, %v2123
        %v2125 = vrot.slane %v2124, 2
        %v2126 = vadd.f32 %v2124, %v2125
        %v2127 = vrot.slane %v2126, 1
        %v2128 = vadd.f32 %v2126, %v2127
        %v2129 = vadd.f32 %v1857, %v1859
        %v2130 = vadd.f32 %v2129, %v1861
        %v2131 = vsel %vm1511, %v1863, 0.0
        %v2132 = vadd.f32 %v2130, %v2131
        %v2133 = vrot.slane %v2132, 4
        %v2134 = vadd.f32 %v2132, %v2133
        %v2135 = vrot.slane %v2134, 2
        %v2136 = vadd.f32 %v2134, %v2135
        %v2137 = vrot.slane %v2136, 1
        %v2138 = vadd.f32 %v2136, %v2137
        %v2139 = vadd.f32 %v1858, %v1860
        %v2140 = vadd.f32 %v2139, %v1862
        %v2141 = vsel %vm1511, %v1864, 0.0
        %v2142 = vadd.f32 %v2140, %v2141
        %v2143 = vrot.slane %v2142, 4
        %v2144 = vadd.f32 %v2142, %v2143
        %v2145 = vrot.slane %v2144, 2
        %v2146 = vadd.f32 %v2144, %v2145
        %v2147 = vrot.slane %v2146, 1
        %v2148 = vadd.f32 %v2146, %v2147
        %v2149 = vadd.f32 %v1865, %v1867
        %v2150 = vadd.f32 %v2149, %v1869
        %v2151 = vsel %vm1511, %v1871, 0.0
        %v2152 = vadd.f32 %v2150, %v2151
        %v2153 = vrot.slane %v2152, 4
        %v2154 = vadd.f32 %v2152, %v2153
        %v2155 = vrot.slane %v2154, 2
        %v2156 = vadd.f32 %v2154, %v2155
        %v2157 = vrot.slane %v2156, 1
        %v2158 = vadd.f32 %v2156, %v2157
        %v2159 = vadd.f32 %v1866, %v1868
        %v2160 = vadd.f32 %v2159, %v1870
        %v2161 = vsel %vm1511, %v1872, 0.0
        %v2162 = vadd.f32 %v2160, %v2161
        %v2163 = vrot.slane %v2162, 4
        %v2164 = vadd.f32 %v2162, %v2163
        %v2165 = vrot.slane %v2164, 2
        %v2166 = vadd.f32 %v2164, %v2165
        %v2167 = vrot.slane %v2166, 1
        %v2168 = vadd.f32 %v2166, %v2167
        %v2169 = vadd.f32 %v1873, %v1875
        %v2170 = vadd.f32 %v2169, %v1877
        %v2171 = vsel %vm1511, %v1879, 0.0
        %v2172 = vadd.f32 %v2170, %v2171
        %v2173 = vrot.slane %v2172, 4
        %v2174 = vadd.f32 %v2172, %v2173
        %v2175 = vrot.slane %v2174, 2
        %v2176 = vadd.f32 %v2174, %v2175
        %v2177 = vrot.slane %v2176, 1
        %v2178 = vadd.f32 %v2176, %v2177
        %v2179 = vadd.f32 %v1874, %v1876
        %v2180 = vadd.f32 %v2179, %v1878
        %v2181 = vsel %vm1511, %v1880, 0.0
        %v2182 = vadd.f32 %v2180, %v2181
        %v2183 = vrot.slane %v2182, 4
        %v2184 = vadd.f32 %v2182, %v2183
        %v2185 = vrot.slane %v2184, 2
        %v2186 = vadd.f32 %v2184, %v2185
        %v2187 = vrot.slane %v2186, 1
        %v2188 = vadd.f32 %v2186, %v2187
        %v2189 = vadd.f32 %v1881, %v1883
        %v2190 = vadd.f32 %v2189, %v1885
        %v2191 = vsel %vm1511, %v1887, 0.0
        %v2192 = vadd.f32 %v2190, %v2191
        %v2193 = vrot.slane %v2192, 4
        %v2194 = vadd.f32 %v2192, %v2193
        %v2195 = vrot.slane %v2194, 2
        %v2196 = vadd.f32 %v2194, %v2195
        %v2197 = vrot.slane %v2196, 1
        %v2198 = vadd.f32 %v2196, %v2197
        %v2199 = vadd.f32 %v1882, %v1884
        %v2200 = vadd.f32 %v2199, %v1886
        %v2201 = vsel %vm1511, %v1888, 0.0
        %v2202 = vadd.f32 %v2200, %v2201
        %v2203 = vrot.slane %v2202, 4
        %v2204 = vadd.f32 %v2202, %v2203
        %v2205 = vrot.slane %v2204, 2
        %v2206 = vadd.f32 %v2204, %v2205
        %v2207 = vrot.slane %v2206, 1
        %v2208 = vadd.f32 %v2206, %v2207
        %v2209 = vld [vmem:[%s6] sm:$0xff]
        %v2210 = vld [vmem:[%s6 + $0x8] sm:$0xff]
        %v2211 = vld [vmem:[%s6 + $0x10] sm:$0xff]
        %v2212 = vld [vmem:[%s6 + $0x18] sm:$0xff]
        %v2213 = vld [vmem:[%s7] sm:$0xff]
        %v2214 = vld [vmem:[%s7 + $0x8] sm:$0xff]
        %v2215 = vld [vmem:[%s7 + $0x10] sm:$0xff]
        %v2216 = vld [vmem:[%s7 + $0x18] sm:$0xff]
        %2218 = vset.pattern.permute.xlu0 0
        %2219 = vperm.xlu0 %2218, %v2213
        %v2220 = vpop.permute.xlu0 %2219
        %2223 = vset.pattern.permute.xlu0 0
        %2224 = vperm.xlu0 %2223, %v2214
        %v2225 = vpop.permute.xlu0 %2224
        %2228 = vset.pattern.permute.xlu0 0
        %2229 = vperm.xlu0 %2228, %v2215
        %v2230 = vpop.permute.xlu0 %2229
        %2233 = vset.pattern.permute.xlu0 0
        %2234 = vperm.xlu0 %2233, %v2216
        %v2235 = vpop.permute.xlu0 %2234
        %vm2269 = vcmask 1041409
        %v2270 = vsel %vm2269, %v1918, %v1898
        %vm2271 = vcmask 1042434
        %v2272 = vsel %vm2271, %v1938, %v2270
        %vm2273 = vcmask 1043459
        %v2274 = vsel %vm2273, %v1958, %v2272
        %vm2275 = vcmask 1044484
        %v2276 = vsel %vm2275, %v1978, %v2274
        %vm2277 = vcmask 1045509
        %v2278 = vsel %vm2277, %v1998, %v2276
        %vm2279 = vcmask 1046534
        %v2280 = vsel %vm2279, %v2018, %v2278
        %vm2281 = vcmask 1047559
        %v2282 = vsel %vm2281, %v2038, %v2280
        %v2283 = vsel %vm2269, %v1928, %v1908
        %v2284 = vsel %vm2271, %v1948, %v2283
        %v2285 = vsel %vm2273, %v1968, %v2284
        %v2286 = vsel %vm2275, %v1988, %v2285
        %v2287 = vsel %vm2277, %v2008, %v2286
        %v2288 = vsel %vm2279, %v2028, %v2287
        %v2289 = vsel %vm2281, %v2048, %v2288
        %v2290 = vsel %vm2269, %v2078, %v2058
        %v2291 = vsel %vm2271, %v2098, %v2290
        %v2292 = vsel %vm2273, %v2118, %v2291
        %v2293 = vsel %vm2275, %v2138, %v2292
        %v2294 = vsel %vm2277, %v2158, %v2293
        %v2295 = vsel %vm2279, %v2178, %v2294
        %v2296 = vsel %vm2281, %v2198, %v2295
        %v2297 = vsel %vm2269, %v2088, %v2068
        %v2298 = vsel %vm2271, %v2108, %v2297
        %v2299 = vsel %vm2273, %v2128, %v2298
        %v2300 = vsel %vm2275, %v2148, %v2299
        %v2301 = vsel %vm2277, %v2168, %v2300
        %v2302 = vsel %vm2279, %v2188, %v2301
        %v2303 = vsel %vm2281, %v2208, %v2302
        %v2309 = vsel %vm841, %v2209, 0
        %v2312 = vsel %vm841, %v2210, 0
        %v2315 = vsel %vm841, %v2211, 0
        %v2318 = vsel %vm841, %v2212, 0
        %2320 = vmatprep.subr.mxu0 0.0
        %2321 = vmatpush1.msra.mxu0 0.0
        %2322 = vmatprep.subr.mxu0 0.0
        %2323 = vmatpush1.msra.mxu0 0.0
        %2324 = vmatprep.subr.mxu0 0.0
        %2325 = vmatpush1.msra.mxu0 0.0
        %2326 = vmatprep.subr.mxu0 0.0
        %2327 = vmatpush1.msra.mxu0 0.0
        %2328 = vmatprep.subr.mxu0 0.0
        %2329 = vmatpush1.msra.mxu0 0.0
        %2330 = vmatprep.subr.mxu0 0.0
        %2331 = vmatpush1.msra.mxu0 0.0
        %2332 = vmatprep.subr.mxu0 0.0
        %2333 = vmatpush1.msra.mxu0 0.0
        %2334 = vmatprep.subr.mxu0 0.0
        %2335 = vmatpush1.msra.mxu0 0.0
        %2336 = vmatprep.subr.mxu0 0.0
        %2337 = vmatpush1.msra.mxu0 0.0
        %2338 = vmatprep.subr.mxu0 0.0
        %2339 = vmatpush1.msra.mxu0 0.0
        %2340 = vmatprep.subr.mxu0 0.0
        %2341 = vmatpush1.msra.mxu0 0.0
        %2342 = vmatprep.subr.mxu0 0.0
        %2343 = vmatpush1.msra.mxu0 0.0
        %2344 = vmatprep.subr.mxu0 0.0
        %2345 = vmatpush1.msra.mxu0 0.0
        %2346 = vmatprep.subr.mxu0 0.0
        %2347 = vmatpush1.msra.mxu0 0.0
        %2348 = vmatprep.subr.mxu0 %v2303
        %2349 = vmatpush1.msra.mxu0 %v2296
        %2350 = vmatprep.subr.mxu0 %v2289
        %2351 = vmatpush1.msra.mxu0 %v2282
        %2352 = vmatprep.subr.mxu0 0.0
        %2353 = vmatpush2.msra.mxu0 0.0
        %2354 = vmatprep.subr.mxu0 0.0
        %2355 = vmatpush2.msra.mxu0 0.0
        %2356 = vmatprep.subr.mxu0 0.0
        %2357 = vmatpush2.msra.mxu0 0.0
        %2358 = vmatprep.subr.mxu0 0.0
        %2359 = vmatpush2.msra.mxu0 0.0
        %2360 = vmatprep.subr.mxu0 0.0
        %2361 = vmatpush2.msra.mxu0 0.0
        %2362 = vmatprep.subr.mxu0 0.0
        %2363 = vmatpush2.msra.mxu0 0.0
        %2364 = vmatprep.subr.mxu0 0.0
        %2365 = vmatpush2.msra.mxu0 0.0
        %2366 = vmatprep.subr.mxu0 0.0
        %2367 = vmatpush2.msra.mxu0 0.0
        %2368 = vmatprep.subr.mxu0 0.0
        %2369 = vmatpush2.msra.mxu0 0.0
        %2370 = vmatprep.subr.mxu0 0.0
        %2371 = vmatpush2.msra.mxu0 0.0
        %2372 = vmatprep.subr.mxu0 0.0
        %2373 = vmatpush2.msra.mxu0 0.0
        %2374 = vmatprep.subr.mxu0 0.0
        %2375 = vmatpush2.msra.mxu0 0.0
        %2376 = vmatprep.subr.mxu0 0.0
        %2377 = vmatpush2.msra.mxu0 0.0
        %2378 = vmatprep.subr.mxu0 0.0
        %2379 = vmatpush2.msra.mxu0 0.0
        %2380 = vmatprep.subr.mxu0 0.0
        %2381 = vmatpush2.msra.mxu0 0.0
        %2382 = vmatprep.subr.mxu0 0.0
        %2383 = vmatpush2.msra.mxu0 0.0
        %2384 = vmatprep.mubr.f32.mxu0 0.0
        %2385 = vmatmul.mubr.f32.gmra.mxu0 %v2309
        %v2386 = vpop.f32.mrf.mxu0
        %v2387 = vadd.f32 %v2220, %v2386
        %v2388 = vpop.f32.mrf.mxu0
        %v2389 = vadd.f32 %v2220, %v2388
        %2390 = vmatprep.mubr.f32.mxu0 0.0
        %2391 = vmatmul.mubr.f32.gmra.mxu0 %v2312
        %v2392 = vpop.f32.mrf.mxu0
        %v2393 = vadd.f32 %v2225, %v2392
        %v2394 = vpop.f32.mrf.mxu0
        %v2395 = vadd.f32 %v2225, %v2394
        %2396 = vmatprep.mubr.f32.mxu0 0.0
        %2397 = vmatmul.mubr.f32.gmra.mxu0 %v2315
        %v2398 = vpop.f32.mrf.mxu0
        %v2399 = vadd.f32 %v2230, %v2398
        %v2400 = vpop.f32.mrf.mxu0
        %v2401 = vadd.f32 %v2230, %v2400
        %2402 = vmatprep.mubr.f32.mxu0 0.0
        %2403 = vmatmul.mubr.f32.gmra.mxu0 %v2318
        %v2404 = vpop.f32.mrf.mxu0
        %v2405 = vadd.f32 %v2235, %v2404
        %v2406 = vpop.f32.mrf.mxu0
        %v2407 = vadd.f32 %v2235, %v2406
        %2408 = vdwg.mxu0
        %v2409 = vld [vmem:[%s8] sm:$0xff]
        %v2410 = vld [vmem:[%s8 + $0x8] sm:$0xff]
        %v2411 = vld [vmem:[%s9] sm:$0xff]
        %v2412 = vld [vmem:[%s9 + $0x8] sm:$0xff]
        %2414 = vset.pattern.permute.xlu0 0
        %2415 = vperm.xlu0 %2414, %v2411
        %v2416 = vpop.permute.xlu0 %2415
        %2419 = vset.pattern.permute.xlu0 0
        %2420 = vperm.xlu0 %2419, %v2412
        %v2421 = vpop.permute.xlu0 %2420
        %v2424 = vsel %vm945, %v2409, 0
        %v2427 = vsel %vm945, %v2410, 0
        %2429 = vmatprep.subr.mxu0 0.0
        %2430 = vmatpush1.msra.mxu0 0.0
        %2431 = vmatprep.subr.mxu0 0.0
        %2432 = vmatpush1.msra.mxu0 0.0
        %2433 = vmatprep.subr.mxu0 0.0
        %2434 = vmatpush1.msra.mxu0 0.0
        %2435 = vmatprep.subr.mxu0 0.0
        %2436 = vmatpush1.msra.mxu0 0.0
        %2437 = vmatprep.subr.mxu0 0.0
        %2438 = vmatpush1.msra.mxu0 0.0
        %2439 = vmatprep.subr.mxu0 0.0
        %2440 = vmatpush1.msra.mxu0 0.0
        %2441 = vmatprep.subr.mxu0 0.0
        %2442 = vmatpush1.msra.mxu0 0.0
        %2443 = vmatprep.subr.mxu0 0.0
        %2444 = vmatpush1.msra.mxu0 0.0
        %2445 = vmatprep.subr.mxu0 0.0
        %2446 = vmatpush1.msra.mxu0 0.0
        %2447 = vmatprep.subr.mxu0 0.0
        %2448 = vmatpush1.msra.mxu0 0.0
        %2449 = vmatprep.subr.mxu0 0.0
        %2450 = vmatpush1.msra.mxu0 0.0
        %2451 = vmatprep.subr.mxu0 0.0
        %2452 = vmatpush1.msra.mxu0 0.0
        %2453 = vmatprep.subr.mxu0 %v2407
        %2454 = vmatpush1.msra.mxu0 %v2405
        %2455 = vmatprep.subr.mxu0 %v2401
        %2456 = vmatpush1.msra.mxu0 %v2399
        %2457 = vmatprep.subr.mxu0 %v2395
        %2458 = vmatpush1.msra.mxu0 %v2393
        %2459 = vmatprep.subr.mxu0 %v2389
        %2460 = vmatpush1.msra.mxu0 %v2387
        %2461 = vmatprep.subr.mxu0 0.0
        %2462 = vmatpush2.msra.mxu0 0.0
        %2463 = vmatprep.subr.mxu0 0.0
        %2464 = vmatpush2.msra.mxu0 0.0
        %2465 = vmatprep.subr.mxu0 0.0
        %2466 = vmatpush2.msra.mxu0 0.0
        %2467 = vmatprep.subr.mxu0 0.0
        %2468 = vmatpush2.msra.mxu0 0.0
        %2469 = vmatprep.subr.mxu0 0.0
        %2470 = vmatpush2.msra.mxu0 0.0
        %2471 = vmatprep.subr.mxu0 0.0
        %2472 = vmatpush2.msra.mxu0 0.0
        %2473 = vmatprep.subr.mxu0 0.0
        %2474 = vmatpush2.msra.mxu0 0.0
        %2475 = vmatprep.subr.mxu0 0.0
        %2476 = vmatpush2.msra.mxu0 0.0
        %2477 = vmatprep.subr.mxu0 0.0
        %2478 = vmatpush2.msra.mxu0 0.0
        %2479 = vmatprep.subr.mxu0 0.0
        %2480 = vmatpush2.msra.mxu0 0.0
        %2481 = vmatprep.subr.mxu0 0.0
        %2482 = vmatpush2.msra.mxu0 0.0
        %2483 = vmatprep.subr.mxu0 0.0
        %2484 = vmatpush2.msra.mxu0 0.0
        %2485 = vmatprep.subr.mxu0 0.0
        %2486 = vmatpush2.msra.mxu0 0.0
        %2487 = vmatprep.subr.mxu0 0.0
        %2488 = vmatpush2.msra.mxu0 0.0
        %2489 = vmatprep.subr.mxu0 0.0
        %2490 = vmatpush2.msra.mxu0 0.0
        %2491 = vmatprep.subr.mxu0 0.0
        %2492 = vmatpush2.msra.mxu0 0.0
        %2493 = vmatprep.mubr.f32.mxu0 0.0
        %2494 = vmatmul.mubr.f32.gmra.mxu0 %v2424
        %v2495 = vpop.f32.mrf.mxu0
        %v2496 = vadd.f32 %v2416, %v2495
        %v2497 = vpop.f32.mrf.mxu0
        %v2498 = vadd.f32 %v2416, %v2497
        %2499 = vmatprep.mubr.f32.mxu0 0.0
        %2500 = vmatmul.mubr.f32.gmra.mxu0 %v2427
        %v2501 = vpop.f32.mrf.mxu0
        %v2502 = vadd.f32 %v2421, %v2501
        %v2503 = vpop.f32.mrf.mxu0
        %v2504 = vadd.f32 %v2421, %v2503
        %2505 = vdwg.mxu0
        %v2506 = vadd.f32 %v2496, %v681
        %v2507 = vadd.f32 %v2498, %v682
        %v2508 = vadd.f32 %v2502, %v683
        %v2509 = vadd.f32 %v2504, %v684
        %2510 = vst [vmem:[%s677] sm:$0xff] %v2506
        %2511 = vst [vmem:[%s677 + $0x8] sm:$0xff] %v2507
        %2512 = vst [vmem:[%s677 + $0x10] sm:$0xff] %v2508
        %2513 = vst [vmem:[%s677 + $0x18] sm:$0xff] %v2509
        %s2514 = sand.u32 %s252, 1
        %s2515 = scalar_lea.sflag [#allocation5], %s2514
        %s2516 = sand.u32 %s252, 1
        %s2517 = smul.addr %s2516, 32
        %s2518 = scalar_lea.vmem [#allocation4], %s2517
        // Predicated region
        $region107: #{tpu_custom_call.1} parent=97 // pred_check
          %p2519 = pneg %p262
        $region108: #{tpu_custom_call.1} parent=97 // pred_check_branch
          %2521 = sbr.rel (%p2519) target = $region110
        $region109: #{tpu_custom_call.1} parent=97 // pred_region
          %s2522 = smul.u32 2, %s24
          %s2524 = ssub.s32 512, 512
          %2525 = vsyncadd %s2515, %s2524
          %s2526 = smul.addr %s2522, 128
          %s2527 = scalar_lea.hbm %s10, %s2526
          %s2528 = sshll.u32 %s2518, 4
          %s2529 = int_to_ptr.vmem [resolvable:$true] %s2528
          %2534 = dma.vmem_to_hbm [thread:$0]  %s2529, 512, %s2527, %s2515, 256, 512, 16
        $region110: #{tpu_custom_call.1} parent=97 // pred_fallthru
          _
      $region98: #{tpu_custom_call.1} parent=5 // pred_fallthru
        _
      %p2535 = scmp.le.s32.totalorder 2, %s19
      // Predicated region
      $region111: #{tpu_custom_call.1} parent=5 // pred_check
        %p2536 = pneg %p2535
      $region112: #{tpu_custom_call.1} parent=5 // pred_check_branch
        %2538 = sbr.rel (%p2536) target = $region114
      $region113: #{tpu_custom_call.1} parent=5 // pred_region
        %s2539 = ssub.s32 %s19, 2
        // Predicated region
        $region115: #{tpu_custom_call.1} parent=113 // pred_check
          %p2540 = pneg %p268
        $region116: #{tpu_custom_call.1} parent=113 // pred_check_branch
          %2542 = sbr.rel (%p2540) target = $region118
        $region117: #{tpu_custom_call.1} parent=113 // pred_region
          %s2543 = sand.u32 %s253, 1
          %s2544 = scalar_lea.sflag [#allocation5], %s2543
          %s2545 = sand.u32 %s253, 1
          %s2546 = smul.addr %s2545, 32
          %s2547 = scalar_lea.vmem [#allocation4], %s2546
          %2548 = dma.done %s2544, 512
        $region118: #{tpu_custom_call.1} parent=113 // pred_fallthru
          _
      $region114: #{tpu_custom_call.1} parent=5 // pred_fallthru
        _
    $region6: #{tpu_custom_call.1} parent=1 // loop_footer
      %s23 = sadd.s32 1, %s19
    $region7: #{tpu_custom_call.1} parent=1 // loop_footer_branch
      %18 = sbr.rel target = $region3
    $region8: #{tpu_custom_call.1} parent=1 // loop_exit
      _
    %2549 = vsyncpa [#allocation5], 1
    %s2550 = scalar_lea.sflag [#allocation5], 1
    %2551 = vsyncpa %s2550, 1

</llo_original>
